<compile_context>
chip_gen: v6e
topology: v6e:2x2x1
jax: 0.10.0
libtpu: 0.0.40
codegen_flags: <defaults>
</compile_context>

<pallas_src>
import functools
import math

import jax
import jax.numpy as jnp
from jax.experimental import pallas as pl
from jax.experimental.pallas import tpu as pltpu

LN_EPS = 1e-6                      # timm ViT uses LayerNorm(eps=1e-6)
_INV_SQRT2 = 1.0 / math.sqrt(2.0)
_NEG_BIG = -1e30                   # finite "-inf" for masked attention logits
_VMEM_LIMIT = 32 * 1024 * 1024     # safe on v5e/v6e/v7x; revisit for real-scale weights


# ----------------------------- in-kernel helpers -----------------------------

def _gelu_exact(x):
    # exact (erf) GELU, matching torch.nn.GELU() default
    return 0.5 * x * (1.0 + jax.lax.erf(x * _INV_SQRT2))


def _layernorm_f32(x, g, b, eps=LN_EPS):
    mu = jnp.mean(x, axis=-1, keepdims=True)
    xc = x - mu
    var = jnp.mean(xc * xc, axis=-1, keepdims=True)
    return xc * jax.lax.rsqrt(var + eps) * g + b


def _round_up(n, m):
    return ((n + m - 1) // m) * m


def _pick_tile(M, cap=256):
    # Largest multiple of 8 that is <= cap and divides M (keeps (8,128) sublane layout
    # happy and gives >1 grid step whenever possible).  Falls back to the full extent for
    # tiny/ragged M (block == full array dim is legal).
    t = min(cap, (M // 8) * 8)
    while t >= 8:
        if M % t == 0:
            return t
        t -= 8
    return M


# ------------------------------- Pallas kernels -------------------------------

def _matmul_bias_kernel(x_ref, w_ref, b_ref, o_ref):
    # x: (tm, K) f32, w: (K, N) bf16 (resident), b: (1, N) f32 -> o: (tm, N) f32
    acc = jnp.dot(x_ref[...].astype(jnp.bfloat16), w_ref[...],
                  preferred_element_type=jnp.float32)
    o_ref[...] = (acc + b_ref[...]).astype(o_ref.dtype)


def matmul_bias(x, w, b):
    M, K = x.shape
    Kw, N = w.shape
    assert K == Kw
    tm = _pick_tile(M)
    return pl.pallas_call(
        _matmul_bias_kernel,
        out_shape=jax.ShapeDtypeStruct((M, N), jnp.float32),
        grid=(M // tm,),
        in_specs=[
            pl.BlockSpec((tm, K), lambda i: (i, 0)),
            pl.BlockSpec((K, N), lambda i: (0, 0)),    # weight resident across row tiles
            pl.BlockSpec((1, N), lambda i: (0, 0)),
        ],
        out_specs=pl.BlockSpec((tm, N), lambda i: (i, 0)),
        compiler_params=pltpu.CompilerParams(dimension_semantics=("parallel",)),
    )(x, w, b.reshape(1, N))


def _mhsa_kernel(x_full_ref, x_q_ref, g_ref, b_ref, qkv_w_ref, qkv_b_ref,
                 proj_w_ref, proj_b_ref, o_ref, kv_ref, *, heads, scale, s_valid):
    # Fully fused MHSA block: LN1 + QKV + softmax + out-proj + residual.
    # x_full: (1, S_pad, D) whole (padded) sequence of this batch element
    # x_q:    (1, tq, D)    query block (also the residual stream for this block)
    # kv_ref: (S_pad, 2D) bf16 VMEM scratch holding [K | V], filled at the first q-block.
    qb = pl.program_id(1)
    S_pad = x_full_ref.shape[1]
    tq = x_q_ref.shape[1]
    D = x_q_ref.shape[2]
    Dh = D // heads

    # (re)compute K,V for the whole padded sequence once per batch element
    @pl.when(qb == 0)
    def _():
        xf = x_full_ref[0].astype(jnp.float32)                          # (S_pad, D)
        y = _layernorm_f32(xf, g_ref[...], b_ref[...])
        kv = jnp.dot(y.astype(jnp.bfloat16), qkv_w_ref[:, D:],
                     preferred_element_type=jnp.float32) + qkv_b_ref[:, D:]
        kv_ref[...] = kv.astype(jnp.bfloat16)                           # (S_pad, 2D)

    # Q for this query block, pre-scaled (single scale mul instead of per-head)
    xq = x_q_ref[0].astype(jnp.float32)                                 # (tq, D)
    yq = _layernorm_f32(xq, g_ref[...], b_ref[...])
    q = (jnp.dot(yq.astype(jnp.bfloat16), qkv_w_ref[:, :D],
                 preferred_element_type=jnp.float32) + qkv_b_ref[:, :D]) * scale
    q = q.astype(jnp.bfloat16)                                          # (tq, D)

    # mask padded key columns (keys >= s_valid must get zero probability)
    key_idx = jax.lax.broadcasted_iota(jnp.int32, (tq, S_pad), 1)
    key_mask = key_idx < s_valid

    kv = kv_ref[...]                                                    # (S_pad, 2D) bf16
    acc = jnp.zeros((tq, D), jnp.float32)
    for h in range(heads):                                              # static unroll
        qh = q[:, h * Dh:(h + 1) * Dh]                                  # (tq, Dh) bf16
        kh = kv[:, h * Dh:(h + 1) * Dh]                                 # (S_pad, Dh) bf16
        vh = kv[:, D + h * Dh:D + (h + 1) * Dh]                         # (S_pad, Dh) bf16
        s = jax.lax.dot_general(qh, kh, (((1,), (1,)), ((), ())),
                                preferred_element_type=jnp.float32)     # (tq, S_pad)
        s = jnp.where(key_mask, s, _NEG_BIG)
        m = jnp.max(s, axis=-1, keepdims=True)
        p = jnp.exp(s - m)
        denom = jnp.sum(p, axis=-1, keepdims=True)
        attn = (p * pl.reciprocal(denom, approx=True)).astype(jnp.bfloat16)  # EUP divide
        oh = jnp.dot(attn, vh, preferred_element_type=jnp.float32)      # (tq, Dh)
        # fold the output projection into the head loop (no per-head concat / relayout)
        acc = acc + jnp.dot(oh.astype(jnp.bfloat16),
                            proj_w_ref[h * Dh:(h + 1) * Dh, :],
                            preferred_element_type=jnp.float32)
    o_ref[0] = (x_q_ref[0].astype(jnp.float32) + acc + proj_b_ref[...]).astype(o_ref.dtype)


def mhsa_block(tok, ln_g, ln_b, qkv_w, qkv_b, proj_w, proj_b, *, heads, s_valid):
    B, S_pad, D = tok.shape
    tq = _pick_tile(S_pad, cap=128)
    n_qb = S_pad // tq
    scale = 1.0 / math.sqrt(D // heads)
    kernel = functools.partial(_mhsa_kernel, heads=heads, scale=scale, s_valid=s_valid)
    return pl.pallas_call(
        kernel,
        out_shape=jax.ShapeDtypeStruct((B, S_pad, D), jnp.float32),
        grid=(B, n_qb),
        in_specs=[
            pl.BlockSpec((1, S_pad, D), lambda b, q: (b, 0, 0)),   # full seq (for K/V)
            pl.BlockSpec((1, tq, D), lambda b, q: (b, q, 0)),      # query / residual block
            pl.BlockSpec((1, D), lambda b, q: (0, 0)),
            pl.BlockSpec((1, D), lambda b, q: (0, 0)),
            pl.BlockSpec((D, 3 * D), lambda b, q: (0, 0)),         # qkv weight resident
            pl.BlockSpec((1, 3 * D), lambda b, q: (0, 0)),
            pl.BlockSpec((D, D), lambda b, q: (0, 0)),             # proj weight resident
            pl.BlockSpec((1, D), lambda b, q: (0, 0)),
        ],
        out_specs=pl.BlockSpec((1, tq, D), lambda b, q: (b, q, 0)),
        scratch_shapes=[pltpu.VMEM((S_pad, 2 * D), jnp.bfloat16)],
        compiler_params=pltpu.CompilerParams(
            dimension_semantics=("parallel", "arbitrary"),
            vmem_limit_bytes=_VMEM_LIMIT),
    )(tok, tok, ln_g.reshape(1, D), ln_b.reshape(1, D),
      qkv_w, qkv_b.reshape(1, 3 * D), proj_w, proj_b.reshape(1, D))


def _ln_mlp_residual_kernel(x_ref, g_ref, b_ref, w1_ref, b1_ref, w2_ref, b2_ref, o_ref):
    # Fused LN2 + fc1 + exact GELU + fc2 + residual add. Matmuls bf16 / f32-acc.
    x = x_ref[...].astype(jnp.float32)
    y = _layernorm_f32(x, g_ref[...], b_ref[...])
    h = jnp.dot(y.astype(jnp.bfloat16), w1_ref[...],
                preferred_element_type=jnp.float32) + b1_ref[...]
    h = _gelu_exact(h)
    out = jnp.dot(h.astype(jnp.bfloat16), w2_ref[...],
                  preferred_element_type=jnp.float32) + b2_ref[...]
    o_ref[...] = (x + out).astype(o_ref.dtype)


def ln_mlp_residual(x, g, b, w1, b1, w2, b2):
    M, D = x.shape
    _, Dm = w1.shape
    tm = _pick_tile(M)
    return pl.pallas_call(
        _ln_mlp_residual_kernel,
        out_shape=jax.ShapeDtypeStruct((M, D), jnp.float32),
        grid=(M // tm,),
        in_specs=[
            pl.BlockSpec((tm, D), lambda i: (i, 0)),
            pl.BlockSpec((1, D), lambda i: (0, 0)),
            pl.BlockSpec((1, D), lambda i: (0, 0)),
            pl.BlockSpec((D, Dm), lambda i: (0, 0)),   # fc1 weight resident
            pl.BlockSpec((1, Dm), lambda i: (0, 0)),
            pl.BlockSpec((Dm, D), lambda i: (0, 0)),   # fc2 weight resident
            pl.BlockSpec((1, D), lambda i: (0, 0)),
        ],
        out_specs=pl.BlockSpec((tm, D), lambda i: (i, 0)),
        compiler_params=pltpu.CompilerParams(dimension_semantics=("parallel",),
                                             vmem_limit_bytes=_VMEM_LIMIT),
    )(x, g.reshape(1, D), b.reshape(1, D), w1, b1.reshape(1, Dm), w2, b2.reshape(1, D))


def _layernorm_kernel(x_ref, g_ref, b_ref, o_ref):
    o_ref[...] = _layernorm_f32(x_ref[...].astype(jnp.float32),
                                g_ref[...], b_ref[...]).astype(o_ref.dtype)


def layernorm(x, g, b):
    M, D = x.shape
    tm = _pick_tile(M)
    return pl.pallas_call(
        _layernorm_kernel,
        out_shape=jax.ShapeDtypeStruct((M, D), jnp.float32),
        grid=(M // tm,),
        in_specs=[pl.BlockSpec((tm, D), lambda i: (i, 0)),
                  pl.BlockSpec((1, D), lambda i: (0, 0)),
                  pl.BlockSpec((1, D), lambda i: (0, 0))],
        out_specs=pl.BlockSpec((tm, D), lambda i: (i, 0)),
        compiler_params=pltpu.CompilerParams(dimension_semantics=("parallel",)),
    )(x, g.reshape(1, D), b.reshape(1, D))


# ------------------------------- parameter init -------------------------------

def init_params(key, *, C, P, D, depth, heads, mlp_dim, n_tokens):
    assert D % heads == 0
    keys = jax.random.split(key, 4 + depth)

    def nrm(k, shape, scale=0.02, dtype=jnp.bfloat16):
        # matmul weights stored bf16 (MXU operand dtype); everything else f32
        return (scale * jax.random.normal(k, shape, jnp.float32)).astype(dtype)

    params = {
        "patch_w": nrm(keys[0], (C * P * P, D)),          # flattened Conv2d(P, stride=P)
        "patch_b": jnp.zeros((D,), jnp.float32),
        "cls": nrm(keys[1], (1, 1, D), dtype=jnp.float32),
        "pos": nrm(keys[2], (1, n_tokens, D), dtype=jnp.float32),
        "norm_g": jnp.ones((D,), jnp.float32),
        "norm_b": jnp.zeros((D,), jnp.float32),
    }
    blocks = []
    for i in range(depth):
        bk = jax.random.split(keys[4 + i], 4)
        blocks.append({
            "ln1_g": jnp.ones((D,), jnp.float32), "ln1_b": jnp.zeros((D,), jnp.float32),
            "qkv_w": nrm(bk[0], (D, 3 * D)), "qkv_b": jnp.zeros((3 * D,), jnp.float32),
            "proj_w": nrm(bk[1], (D, D)), "proj_b": jnp.zeros((D,), jnp.float32),
            "ln2_g": jnp.ones((D,), jnp.float32), "ln2_b": jnp.zeros((D,), jnp.float32),
            "fc1_w": nrm(bk[2], (D, mlp_dim)), "fc1_b": jnp.zeros((mlp_dim,), jnp.float32),
            "fc2_w": nrm(bk[3], (mlp_dim, D)), "fc2_b": jnp.zeros((D,), jnp.float32),
        })
    # Stack per-layer params on a leading depth axis so the block loop is a lax.scan
    # (single traced block; XLA can pipeline next-layer weight loads behind compute).
    params["blocks"] = jax.tree.map(lambda *xs: jnp.stack(xs), *blocks)
    return params


# -------------------------------- forward pass --------------------------------

def vit_forward(x, params, *, P, heads):
    # x: (B, C, H, W) NCHW, same as the PyTorch module input.
    B, C, H, W = x.shape
    gh, gw = H // P, W // P
    N = gh * gw
    D = params["patch_w"].shape[1]

    # patchify == Conv2d(kernel=P, stride=P) on NCHW followed by flatten(2).transpose(1,2)
    patches = (x.reshape(B, C, gh, P, gw, P)
                 .transpose(0, 2, 4, 1, 3, 5)
                 .reshape(B * N, C * P * P))
    tok = matmul_bias(patches, params["patch_w"], params["patch_b"]).reshape(B, N, D)

    cls = jnp.broadcast_to(params["cls"], (B, 1, D))
    tok = jnp.concatenate([cls, tok], axis=1) + params["pos"]       # (B, S, D)
    S = N + 1

    # Pad the sequence so row tiles are 8-aligned and grids get >1 step; padded KEY
    # columns are masked inside the attention kernel, padded rows are never read back.
    # TODO(synk): at real scale (S=197) pad to 256 so the (S,S) score tiles are lane-dense.
    S_pad = _round_up(S, 8)
    tok = jnp.pad(tok, ((0, 0), (0, S_pad - S), (0, 0)))
    M = B * S_pad
    # pos_drop / attn_drop / proj_drop / drop_path are Dropout(p=0) at eval -> identity.

    def block_step(tok, blk):
        # --- MHSA: one fused pallas_call (LN1 + QKV + attention + proj + residual) ---
        tok = mhsa_block(tok, blk["ln1_g"], blk["ln1_b"], blk["qkv_w"], blk["qkv_b"],
                         blk["proj_w"], blk["proj_b"], heads=heads, s_valid=S)
        # --- MLP: fused LN2 + fc1 + GELU + fc2 + residual ---
        tok = ln_mlp_residual(tok.reshape(M, D), blk["ln2_g"], blk["ln2_b"],
                              blk["fc1_w"], blk["fc1_b"],
                              blk["fc2_w"], blk["fc2_b"]).reshape(B, S_pad, D)
        return tok, None

    tok, _ = jax.lax.scan(block_step, tok, params["blocks"])

    # reset_classifier(0): head is Identity, global_pool='token'.  Final LN is per-token,
    # so pool the CLS row first and LayerNorm only (B, D) rows.
    cls_tok = tok[:, 0]
    return layernorm(cls_tok, params["norm_g"], params["norm_b"])


# ------------------------- pure-JAX reference (check) --------------------------

def _ln_ref(x, g, b, eps=LN_EPS):
    mu = jnp.mean(x, axis=-1, keepdims=True)
    var = jnp.mean((x - mu) ** 2, axis=-1, keepdims=True)
    return (x - mu) * jax.lax.rsqrt(var + eps) * g + b


def vit_reference(x, params, *, P, heads):
    B, C, H, W = x.shape
    gh, gw = H // P, W // P
    N = gh * gw
    D = params["patch_w"].shape[1]
    Dh = D // heads
    patches = (x.reshape(B, C, gh, P, gw, P)
                 .transpose(0, 2, 4, 1, 3, 5)
                 .reshape(B * N, C * P * P))
    tok = (patches @ params["patch_w"] + params["patch_b"]).reshape(B, N, D)
    tok = jnp.concatenate([jnp.broadcast_to(params["cls"], (B, 1, D)), tok], axis=1) + params["pos"]
    S = N + 1
    depth = params["blocks"]["qkv_w"].shape[0]
    for li in range(depth):
        blk = jax.tree.map(lambda a: a[li], params["blocks"])
        y = _ln_ref(tok, blk["ln1_g"], blk["ln1_b"])
        qkv = y.reshape(B * S, D) @ blk["qkv_w"] + blk["qkv_b"]
        qkv = qkv.reshape(B, S, 3, heads, Dh).transpose(2, 0, 3, 1, 4)
        q, k, v = qkv[0], qkv[1], qkv[2]
        s = jnp.einsum("bhqd,bhkd->bhqk", q, k) / math.sqrt(Dh)
        a = jax.nn.softmax(s, axis=-1)
        o = jnp.einsum("bhqk,bhkd->bhqd", a, v).transpose(0, 2, 1, 3).reshape(B * S, D)
        o = o @ blk["proj_w"] + blk["proj_b"]
        tok = tok + o.reshape(B, S, D)
        y = _ln_ref(tok, blk["ln2_g"], blk["ln2_b"]).reshape(B * S, D)
        h1 = jax.nn.gelu(y @ blk["fc1_w"] + blk["fc1_b"], approximate=False)
        h2 = h1 @ blk["fc2_w"] + blk["fc2_b"]
        tok = tok + h2.reshape(B, S, D)
    tok = _ln_ref(tok, params["norm_g"], params["norm_b"])
    return tok[:, 0]


# ------------------------------------ main ------------------------------------

if __name__ == "__main__":
    B, C, H, W = 2, 3, 16, 16           # NCHW input (ViT backbone expects 3 channels)
    P, D, depth, heads, mlp_dim = 8, 32, 2, 4, 128
    n_tokens = (H // P) * (W // P) + 1

    key = jax.random.PRNGKey(0)
    kx, kp = jax.random.split(key)
    x = jax.random.normal(kx, (B, C, H, W), jnp.float32)
    params = init_params(kp, C=C, P=P, D=D, depth=depth, heads=heads,
                         mlp_dim=mlp_dim, n_tokens=n_tokens)

    fwd = jax.jit(functools.partial(vit_forward, P=P, heads=heads))
    out = jax.block_until_ready(fwd(x, params))

    assert out.shape == (B, D), out.shape
    assert bool(jnp.all(jnp.isfinite(out)))

    ref = jax.block_until_ready(
        jax.jit(functools.partial(vit_reference, P=P, heads=heads))(x, params))
    max_err = float(jnp.max(jnp.abs(out - ref)))
    # bf16 MXU operands + approx reciprocal in softmax vs f32 reference -> allow ~3e-2
    assert bool(jnp.allclose(out, ref, atol=3e-2, rtol=3e-2)), max_err

    print("KERNEL_OK")
</pallas_src>

<mosaic_0001>
module attributes {stable_mosaic.version = 11 : i64} {
  func.func @_matmul_bias_kernel(%arg0: i32, %arg1: memref<8x192xf32, #tpu.memory_space<vmem>>, %arg2: memref<192x32xbf16, #tpu.memory_space<vmem>>, %arg3: memref<1x32xf32, #tpu.memory_space<vmem>>, %arg4: memref<8x32xf32, #tpu.memory_space<vmem>>) attributes {dimension_semantics = [#tpu.dimension_semantics<parallel>], iteration_bounds = array<i64: 1>, scalar_prefetch = 0 : i64, scratch_operands = 0 : i64, tpu.core_type = #tpu.core_type<tc>, window_params = [{transform_indices = @transform_0, window_bounds = array<i64: 8, 192>}, {pipeline_mode = #tpu.pipeline_mode<synchronous>, transform_indices = @transform_1, window_bounds = array<i64: 192, 32>}, {pipeline_mode = #tpu.pipeline_mode<synchronous>, transform_indices = @transform_2, window_bounds = array<i64: 1, 32>}, {transform_indices = @transform_3, window_bounds = array<i64: 8, 32>}]} {
    %c0 = arith.constant 0 : index
    %c0_0 = arith.constant 0 : index
    %0 = vector.load %arg1[%c0, %c0_0] : memref<8x192xf32, #tpu.memory_space<vmem>>, vector<8x192xf32>
    %1 = arith.truncf %0 : vector<8x192xf32> to vector<8x192xbf16>
    %c0_1 = arith.constant 0 : index
    %c0_2 = arith.constant 0 : index
    %2 = vector.load %arg2[%c0_1, %c0_2] : memref<192x32xbf16, #tpu.memory_space<vmem>>, vector<192x32xbf16>
    %cst = arith.constant dense<0.000000e+00> : vector<8x32xf32>
    %3 = tpu.matmul %1, %2, %cst {dimension_numbers = #tpu.dot_dimension_numbers<[1], [0], [0], [1], [0, 0, 1, 1], [], []>} : vector<8x192xbf16>, vector<192x32xbf16>, vector<8x32xf32> -> vector<8x32xf32>
    %c0_3 = arith.constant 0 : index
    %c0_4 = arith.constant 0 : index
    %4 = vector.load %arg3[%c0_3, %c0_4] : memref<1x32xf32, #tpu.memory_space<vmem>>, vector<1x32xf32>
    %5 = vector.broadcast %4 : vector<1x32xf32> to vector<8x32xf32>
    %6 = arith.addf %3, %5 : vector<8x32xf32>
    %c0_5 = arith.constant 0 : index
    %c0_6 = arith.constant 0 : index
    %7 = vector.load %arg4[%c0_5, %c0_6] : memref<8x32xf32, #tpu.memory_space<vmem>>, vector<8x32xf32>
    tpu.vector_store %arg4[%c0_5, %c0_6], %6 {strides = array<i32>} : memref<8x32xf32, #tpu.memory_space<vmem>>, vector<8x32xf32>,
    return
  }
  func.func @transform_0(%arg0: i32) -> (i32, i32) {
    %c0_i32 = arith.constant 0 : i32
    %c0_i32_0 = arith.constant 0 : i32
    return %arg0, %c0_i32 : i32, i32
  }
  func.func @transform_1(%arg0: i32) -> (i32, i32) {
    %c0_i32 = arith.constant 0 : i32
    %c0_i32_0 = arith.constant 0 : i32
    %c0_i32_1 = arith.constant 0 : i32
    return %c0_i32, %c0_i32_0 : i32, i32
  }
  func.func @transform_2(%arg0: i32) -> (i32, i32) {
    %c0_i32 = arith.constant 0 : i32
    %c0_i32_0 = arith.constant 0 : i32
    %c0_i32_1 = arith.constant 0 : i32
    return %c0_i32, %c0_i32_0 : i32, i32
  }
  func.func @transform_3(%arg0: i32) -> (i32, i32) {
    %c0_i32 = arith.constant 0 : i32
    %c0_i32_0 = arith.constant 0 : i32
    return %arg0, %c0_i32 : i32, i32
  }
}

module attributes {stable_mosaic.version = 11 : i64} {
  func.func @_mhsa_kernel(%arg0: i32, %arg1: i32, %arg2: memref<1x8x32xf32, #tpu.memory_space<vmem>>, %arg3: memref<1x8x32xf32, #tpu.memory_space<vmem>>, %arg4: memref<1x32xf32, #tpu.memory_space<vmem>>, %arg5: memref<1x32xf32, #tpu.memory_space<vmem>>, %arg6: memref<32x96xbf16, #tpu.memory_space<vmem>>, %arg7: memref<1x96xf32, #tpu.memory_space<vmem>>, %arg8: memref<32x32xbf16, #tpu.memory_space<vmem>>, %arg9: memref<1x32xf32, #tpu.memory_space<vmem>>, %arg10: memref<1x8x32xf32, #tpu.memory_space<vmem>>, %arg11: memref<8x64xbf16, #tpu.memory_space<vmem>>) attributes {dimension_semantics = [#tpu.dimension_semantics<parallel>, #tpu.dimension_semantics<arbitrary>], iteration_bounds = array<i64: 2, 1>, scalar_prefetch = 0 : i64, scratch_operands = 1 : i64, tpu.core_type = #tpu.core_type<tc>, window_params = [{transform_indices = @transform_0, window_bounds = array<i64: 1, 8, 32>}, {transform_indices = @transform_1, window_bounds = array<i64: 1, 8, 32>}, {pipeline_mode = #tpu.pipeline_mode<synchronous>, transform_indices = @transform_2, window_bounds = array<i64: 1, 32>}, {pipeline_mode = #tpu.pipeline_mode<synchronous>, transform_indices = @transform_3, window_bounds = array<i64: 1, 32>}, {pipeline_mode = #tpu.pipeline_mode<synchronous>, transform_indices = @transform_4, window_bounds = array<i64: 32, 96>}, {pipeline_mode = #tpu.pipeline_mode<synchronous>, transform_indices = @transform_5, window_bounds = array<i64: 1, 96>}, {pipeline_mode = #tpu.pipeline_mode<synchronous>, transform_indices = @transform_6, window_bounds = array<i64: 32, 32>}, {pipeline_mode = #tpu.pipeline_mode<synchronous>, transform_indices = @transform_7, window_bounds = array<i64: 1, 32>}, {transform_indices = @transform_8, window_bounds = array<i64: 1, 8, 32>}]} {
    %c0_i32 = arith.constant 0 : i32
    %0 = arith.cmpi eq, %arg1, %c0_i32 : i32
    %1 = arith.extui %0 : i1 to i32
    %c0_i32_0 = arith.constant 0 : i32
    %2 = arith.cmpi ne, %1, %c0_i32_0 : i32
    scf.if %2 {
      %c0_57 = arith.constant 0 : index
      %c0_58 = arith.constant 0 : index
      %c0_59 = arith.constant 0 : index
      %138 = vector.load %arg2[%c0_57, %c0_58, %c0_59] : memref<1x8x32xf32, #tpu.memory_space<vmem>>, vector<1x8x32xf32>
      %139 = vector.shape_cast %138 : vector<1x8x32xf32> to vector<8x32xf32>
      %c0_60 = arith.constant 0 : index
      %c0_61 = arith.constant 0 : index
      %140 = vector.load %arg4[%c0_60, %c0_61] : memref<1x32xf32, #tpu.memory_space<vmem>>, vector<1x32xf32>
      %c0_62 = arith.constant 0 : index
      %c0_63 = arith.constant 0 : index
      %141 = vector.load %arg5[%c0_62, %c0_63] : memref<1x32xf32, #tpu.memory_space<vmem>>, vector<1x32xf32>
      %cst_64 = arith.constant dense<0.000000e+00> : vector<8xf32>
      %142 = vector.multi_reduction <add>, %139, %cst_64 [1] : vector<8x32xf32> to vector<8xf32>
      %143 = vector.shape_cast %142 : vector<8xf32> to vector<8x1xf32>
      %cst_65 = arith.constant 3.200000e+01 : f32
      %144 = vector.broadcast %cst_65 : f32 to vector<8x1xf32>
      %145 = arith.divf %143, %144 : vector<8x1xf32>
      %146 = vector.broadcast %145 : vector<8x1xf32> to vector<8x32xf32>
      %147 = arith.subf %139, %146 : vector<8x32xf32>
      %148 = arith.mulf %147, %147 : vector<8x32xf32>
      %cst_66 = arith.constant dense<0.000000e+00> : vector<8xf32>
      %149 = vector.multi_reduction <add>, %148, %cst_66 [1] : vector<8x32xf32> to vector<8xf32>
      %150 = vector.shape_cast %149 : vector<8xf32> to vector<8x1xf32>
      %cst_67 = arith.constant 3.200000e+01 : f32
      %151 = vector.broadcast %cst_67 : f32 to vector<8x1xf32>
      %152 = arith.divf %150, %151 : vector<8x1xf32>
      %cst_68 = arith.constant 9.99999997E-7 : f32
      %153 = vector.broadcast %cst_68 : f32 to vector<8x1xf32>
      %154 = arith.addf %152, %153 : vector<8x1xf32>
      %155 = math.rsqrt %154 : vector<8x1xf32>
      %156 = vector.broadcast %155 : vector<8x1xf32> to vector<8x32xf32>
      %157 = arith.mulf %147, %156 : vector<8x32xf32>
      %158 = vector.broadcast %140 : vector<1x32xf32> to vector<8x32xf32>
      %159 = arith.mulf %157, %158 : vector<8x32xf32>
      %160 = vector.broadcast %141 : vector<1x32xf32> to vector<8x32xf32>
      %161 = arith.addf %159, %160 : vector<8x32xf32>
      %162 = arith.truncf %161 : vector<8x32xf32> to vector<8x32xbf16>
      %c0_69 = arith.constant 0 : index
      %c32 = arith.constant 32 : index
      %163 = vector.load %arg6[%c0_69, %c32] : memref<32x96xbf16, #tpu.memory_space<vmem>>, vector<32x64xbf16>
      %cst_70 = arith.constant dense<0.000000e+00> : vector<8x64xf32>
      %164 = tpu.matmul %162, %163, %cst_70 {dimension_numbers = #tpu.dot_dimension_numbers<[1], [0], [0], [1], [0, 0, 1, 1], [], []>} : vector<8x32xbf16>, vector<32x64xbf16>, vector<8x64xf32> -> vector<8x64xf32>
      %c0_71 = arith.constant 0 : index
      %c32_72 = arith.constant 32 : index
      %165 = vector.load %arg7[%c0_71, %c32_72] : memref<1x96xf32, #tpu.memory_space<vmem>>, vector<1x64xf32>
      %166 = vector.broadcast %165 : vector<1x64xf32> to vector<8x64xf32>
      %167 = arith.addf %164, %166 : vector<8x64xf32>
      %168 = arith.truncf %167 : vector<8x64xf32> to vector<8x64xbf16>
      %c0_73 = arith.constant 0 : index
      %c0_74 = arith.constant 0 : index
      %169 = vector.load %arg11[%c0_73, %c0_74] : memref<8x64xbf16, #tpu.memory_space<vmem>>, vector<8x64xbf16>
      tpu.vector_store %arg11[%c0_73, %c0_74], %168 {strides = array<i32>} : memref<8x64xbf16, #tpu.memory_space<vmem>>, vector<8x64xbf16>,
    } else {
    }
    %c0 = arith.constant 0 : index
    %c0_1 = arith.constant 0 : index
    %c0_2 = arith.constant 0 : index
    %3 = vector.load %arg3[%c0, %c0_1, %c0_2] : memref<1x8x32xf32, #tpu.memory_space<vmem>>, vector<1x8x32xf32>
    %4 = vector.shape_cast %3 : vector<1x8x32xf32> to vector<8x32xf32>
    %c0_3 = arith.constant 0 : index
    %c0_4 = arith.constant 0 : index
    %5 = vector.load %arg4[%c0_3, %c0_4] : memref<1x32xf32, #tpu.memory_space<vmem>>, vector<1x32xf32>
    %c0_5 = arith.constant 0 : index
    %c0_6 = arith.constant 0 : index
    %6 = vector.load %arg5[%c0_5, %c0_6] : memref<1x32xf32, #tpu.memory_space<vmem>>, vector<1x32xf32>
    %cst = arith.constant dense<0.000000e+00> : vector<8xf32>
    %7 = vector.multi_reduction <add>, %4, %cst [1] : vector<8x32xf32> to vector<8xf32>
    %8 = vector.shape_cast %7 : vector<8xf32> to vector<8x1xf32>
    %cst_7 = arith.constant 3.200000e+01 : f32
    %9 = vector.broadcast %cst_7 : f32 to vector<8x1xf32>
    %10 = arith.divf %8, %9 : vector<8x1xf32>
    %11 = vector.broadcast %10 : vector<8x1xf32> to vector<8x32xf32>
    %12 = arith.subf %4, %11 : vector<8x32xf32>
    %13 = arith.mulf %12, %12 : vector<8x32xf32>
    %cst_8 = arith.constant dense<0.000000e+00> : vector<8xf32>
    %14 = vector.multi_reduction <add>, %13, %cst_8 [1] : vector<8x32xf32> to vector<8xf32>
    %15 = vector.shape_cast %14 : vector<8xf32> to vector<8x1xf32>
    %cst_9 = arith.constant 3.200000e+01 : f32
    %16 = vector.broadcast %cst_9 : f32 to vector<8x1xf32>
    %17 = arith.divf %15, %16 : vector<8x1xf32>
    %cst_10 = arith.constant 9.99999997E-7 : f32
    %18 = vector.broadcast %cst_10 : f32 to vector<8x1xf32>
    %19 = arith.addf %17, %18 : vector<8x1xf32>
    %20 = math.rsqrt %19 : vector<8x1xf32>
    %21 = vector.broadcast %20 : vector<8x1xf32> to vector<8x32xf32>
    %22 = arith.mulf %12, %21 : vector<8x32xf32>
    %23 = vector.broadcast %5 : vector<1x32xf32> to vector<8x32xf32>
    %24 = arith.mulf %22, %23 : vector<8x32xf32>
    %25 = vector.broadcast %6 : vector<1x32xf32> to vector<8x32xf32>
    %26 = arith.addf %24, %25 : vector<8x32xf32>
    %27 = arith.truncf %26 : vector<8x32xf32> to vector<8x32xbf16>
    %c0_11 = arith.constant 0 : index
    %c0_12 = arith.constant 0 : index
    %28 = vector.load %arg6[%c0_11, %c0_12] : memref<32x96xbf16, #tpu.memory_space<vmem>>, vector<32x32xbf16>
    %cst_13 = arith.constant dense<0.000000e+00> : vector<8x32xf32>
    %29 = tpu.matmul %27, %28, %cst_13 {dimension_numbers = #tpu.dot_dimension_numbers<[1], [0], [0], [1], [0, 0, 1, 1], [], []>} : vector<8x32xbf16>, vector<32x32xbf16>, vector<8x32xf32> -> vector<8x32xf32>
    %c0_14 = arith.constant 0 : index
    %c0_15 = arith.constant 0 : index
    %30 = vector.load %arg7[%c0_14, %c0_15] : memref<1x96xf32, #tpu.memory_space<vmem>>, vector<1x32xf32>
    %31 = vector.broadcast %30 : vector<1x32xf32> to vector<8x32xf32>
    %32 = arith.addf %29, %31 : vector<8x32xf32>
    %cst_16 = arith.constant 0.353553385 : f32
    %33 = vector.broadcast %cst_16 : f32 to vector<8x32xf32>
    %34 = arith.mulf %32, %33 : vector<8x32xf32>
    %35 = arith.truncf %34 : vector<8x32xf32> to vector<8x32xbf16>
    %36 = tpu.iota {dimensions = array<i32: 1>} : vector<8x8xi32>
    %c5_i32 = arith.constant 5 : i32
    %37 = vector.broadcast %c5_i32 : i32 to vector<8x8xi32>
    %38 = arith.cmpi slt, %36, %37 : vector<8x8xi32>
    %c0_17 = arith.constant 0 : index
    %c0_18 = arith.constant 0 : index
    %39 = vector.load %arg11[%c0_17, %c0_18] : memref<8x64xbf16, #tpu.memory_space<vmem>>, vector<8x64xbf16>
    %cst_19 = arith.constant 0.000000e+00 : f32
    %40 = vector.broadcast %cst_19 : f32 to vector<8x32xf32>
    %41 = vector.extract_strided_slice %35 {offsets = [0, 0], sizes = [8, 8], strides = [1, 1]} : vector<8x32xbf16> to vector<8x8xbf16>
    %42 = vector.extract_strided_slice %39 {offsets = [0, 0], sizes = [8, 8], strides = [1, 1]} : vector<8x64xbf16> to vector<8x8xbf16>
    %43 = vector.extract_strided_slice %39 {offsets = [0, 32], sizes = [8, 8], strides = [1, 1]} : vector<8x64xbf16> to vector<8x8xbf16>
    %cst_20 = arith.constant dense<0.000000e+00> : vector<8x8xf32>
    %44 = tpu.matmul %41, %42, %cst_20 {dimension_numbers = #tpu.dot_dimension_numbers<[1], [1], [0], [0], [0, 0, 1, 0], [], []>} : vector<8x8xbf16>, vector<8x8xbf16>, vector<8x8xf32> -> vector<8x8xf32>
    %cst_21 = arith.constant -1.000000e+30 : f32
    %45 = vector.broadcast %cst_21 : f32 to vector<8x8xf32>
    %46 = arith.select %38, %44, %45 : vector<8x8xi1>, vector<8x8xf32>
    %cst_22 = arith.constant dense<0xFF800000> : vector<8xf32>
    %47 = vector.multi_reduction <maximumf>, %46, %cst_22 [1] : vector<8x8xf32> to vector<8xf32>
    %48 = vector.shape_cast %47 : vector<8xf32> to vector<8x1xf32>
    %49 = vector.broadcast %48 : vector<8x1xf32> to vector<8x8xf32>
    %50 = arith.subf %46, %49 : vector<8x8xf32>
    %51 = math.exp %50 : vector<8x8xf32>
    %cst_23 = arith.constant dense<0.000000e+00> : vector<8xf32>
    %52 = vector.multi_reduction <add>, %51, %cst_23 [1] : vector<8x8xf32> to vector<8xf32>
    %53 = vector.shape_cast %52 : vector<8xf32> to vector<8x1xf32>
    %54 = tpu.reciprocal %53 {approx = true} : vector<8x1xf32> -> vector<8x1xf32>
    %55 = vector.broadcast %54 : vector<8x1xf32> to vector<8x8xf32>
    %56 = arith.mulf %51, %55 : vector<8x8xf32>
    %57 = arith.truncf %56 : vector<8x8xf32> to vector<8x8xbf16>
    %cst_24 = arith.constant dense<0.000000e+00> : vector<8x8xf32>
    %58 = tpu.matmul %57, %43, %cst_24 {dimension_numbers = #tpu.dot_dimension_numbers<[1], [0], [0], [1], [0, 0, 1, 1], [], []>} : vector<8x8xbf16>, vector<8x8xbf16>, vector<8x8xf32> -> vector<8x8xf32>
    %59 = arith.truncf %58 : vector<8x8xf32> to vector<8x8xbf16>
    %c0_25 = arith.constant 0 : index
    %c0_26 = arith.constant 0 : index
    %60 = vector.load %arg8[%c0_25, %c0_26] : memref<32x32xbf16, #tpu.memory_space<vmem>>, vector<8x32xbf16>
    %cst_27 = arith.constant dense<0.000000e+00> : vector<8x32xf32>
    %61 = tpu.matmul %59, %60, %cst_27 {dimension_numbers = #tpu.dot_dimension_numbers<[1], [0], [0], [1], [0, 0, 1, 1], [], []>} : vector<8x8xbf16>, vector<8x32xbf16>, vector<8x32xf32> -> vector<8x32xf32>
    %62 = arith.addf %40, %61 : vector<8x32xf32>
    %63 = vector.extract_strided_slice %35 {offsets = [0, 8], sizes = [8, 8], strides = [1, 1]} : vector<8x32xbf16> to vector<8x8xbf16>
    %64 = vector.extract_strided_slice %39 {offsets = [0, 8], sizes = [8, 8], strides = [1, 1]} : vector<8x64xbf16> to vector<8x8xbf16>
    %65 = vector.extract_strided_slice %39 {offsets = [0, 40], sizes = [8, 8], strides = [1, 1]} : vector<8x64xbf16> to vector<8x8xbf16>
    %cst_28 = arith.constant dense<0.000000e+00> : vector<8x8xf32>
    %66 = tpu.matmul %63, %64, %cst_28 {dimension_numbers = #tpu.dot_dimension_numbers<[1], [1], [0], [0], [0, 0, 1, 0], [], []>} : vector<8x8xbf16>, vector<8x8xbf16>, vector<8x8xf32> -> vector<8x8xf32>
    %cst_29 = arith.constant -1.000000e+30 : f32
    %67 = vector.broadcast %cst_29 : f32 to vector<8x8xf32>
    %68 = arith.select %38, %66, %67 : vector<8x8xi1>, vector<8x8xf32>
    %cst_30 = arith.constant dense<0xFF800000> : vector<8xf32>
    %69 = vector.multi_reduction <maximumf>, %68, %cst_30 [1] : vector<8x8xf32> to vector<8xf32>
    %70 = vector.shape_cast %69 : vector<8xf32> to vector<8x1xf32>
    %71 = vector.broadcast %70 : vector<8x1xf32> to vector<8x8xf32>
    %72 = arith.subf %68, %71 : vector<8x8xf32>
    %73 = math.exp %72 : vector<8x8xf32>
    %cst_31 = arith.constant dense<0.000000e+00> : vector<8xf32>
    %74 = vector.multi_reduction <add>, %73, %cst_31 [1] : vector<8x8xf32> to vector<8xf32>
    %75 = vector.shape_cast %74 : vector<8xf32> to vector<8x1xf32>
    %76 = tpu.reciprocal %75 {approx = true} : vector<8x1xf32> -> vector<8x1xf32>
    %77 = vector.broadcast %76 : vector<8x1xf32> to vector<8x8xf32>
    %78 = arith.mulf %73, %77 : vector<8x8xf32>
    %79 = arith.truncf %78 : vector<8x8xf32> to vector<8x8xbf16>
    %cst_32 = arith.constant dense<0.000000e+00> : vector<8x8xf32>
    %80 = tpu.matmul %79, %65, %cst_32 {dimension_numbers = #tpu.dot_dimension_numbers<[1], [0], [0], [1], [0, 0, 1, 1], [], []>} : vector<8x8xbf16>, vector<8x8xbf16>, vector<8x8xf32> -> vector<8x8xf32>
    %81 = arith.truncf %80 : vector<8x8xf32> to vector<8x8xbf16>
    %c8 = arith.constant 8 : index
    %c0_33 = arith.constant 0 : index
    %82 = vector.load %arg8[%c8, %c0_33] : memref<32x32xbf16, #tpu.memory_space<vmem>>, vector<8x32xbf16>
    %cst_34 = arith.constant dense<0.000000e+00> : vector<8x32xf32>
    %83 = tpu.matmul %81, %82, %cst_34 {dimension_numbers = #tpu.dot_dimension_numbers<[1], [0], [0], [1], [0, 0, 1, 1], [], []>} : vector<8x8xbf16>, vector<8x32xbf16>, vector<8x32xf32> -> vector<8x32xf32>
    %84 = arith.addf %62, %83 : vector<8x32xf32>
    %85 = vector.extract_strided_slice %35 {offsets = [0, 16], sizes = [8, 8], strides = [1, 1]} : vector<8x32xbf16> to vector<8x8xbf16>
    %86 = vector.extract_strided_slice %39 {offsets = [0, 16], sizes = [8, 8], strides = [1, 1]} : vector<8x64xbf16> to vector<8x8xbf16>
    %87 = vector.extract_strided_slice %39 {offsets = [0, 48], sizes = [8, 8], strides = [1, 1]} : vector<8x64xbf16> to vector<8x8xbf16>
    %cst_35 = arith.constant dense<0.000000e+00> : vector<8x8xf32>
    %88 = tpu.matmul %85, %86, %cst_35 {dimension_numbers = #tpu.dot_dimension_numbers<[1], [1], [0], [0], [0, 0, 1, 0], [], []>} : vector<8x8xbf16>, vector<8x8xbf16>, vector<8x8xf32> -> vector<8x8xf32>
    %cst_36 = arith.constant -1.000000e+30 : f32
    %89 = vector.broadcast %cst_36 : f32 to vector<8x8xf32>
    %90 = arith.select %38, %88, %89 : vector<8x8xi1>, vector<8x8xf32>
    %cst_37 = arith.constant dense<0xFF800000> : vector<8xf32>
    %91 = vector.multi_reduction <maximumf>, %90, %cst_37 [1] : vector<8x8xf32> to vector<8xf32>
    %92 = vector.shape_cast %91 : vector<8xf32> to vector<8x1xf32>
    %93 = vector.broadcast %92 : vector<8x1xf32> to vector<8x8xf32>
    %94 = arith.subf %90, %93 : vector<8x8xf32>
    %95 = math.exp %94 : vector<8x8xf32>
    %cst_38 = arith.constant dense<0.000000e+00> : vector<8xf32>
    %96 = vector.multi_reduction <add>, %95, %cst_38 [1] : vector<8x8xf32> to vector<8xf32>
    %97 = vector.shape_cast %96 : vector<8xf32> to vector<8x1xf32>
    %98 = tpu.reciprocal %97 {approx = true} : vector<8x1xf32> -> vector<8x1xf32>
    %99 = vector.broadcast %98 : vector<8x1xf32> to vector<8x8xf32>
    %100 = arith.mulf %95, %99 : vector<8x8xf32>
    %101 = arith.truncf %100 : vector<8x8xf32> to vector<8x8xbf16>
    %cst_39 = arith.constant dense<0.000000e+00> : vector<8x8xf32>
    %102 = tpu.matmul %101, %87, %cst_39 {dimension_numbers = #tpu.dot_dimension_numbers<[1], [0], [0], [1], [0, 0, 1, 1], [], []>} : vector<8x8xbf16>, vector<8x8xbf16>, vector<8x8xf32> -> vector<8x8xf32>
    %103 = arith.truncf %102 : vector<8x8xf32> to vector<8x8xbf16>
    %c16 = arith.constant 16 : index
    %c0_40 = arith.constant 0 : index
    %104 = vector.load %arg8[%c16, %c0_40] : memref<32x32xbf16, #tpu.memory_space<vmem>>, vector<8x32xbf16>
    %cst_41 = arith.constant dense<0.000000e+00> : vector<8x32xf32>
    %105 = tpu.matmul %103, %104, %cst_41 {dimension_numbers = #tpu.dot_dimension_numbers<[1], [0], [0], [1], [0, 0, 1, 1], [], []>} : vector<8x8xbf16>, vector<8x32xbf16>, vector<8x32xf32> -> vector<8x32xf32>
    %106 = arith.addf %84, %105 : vector<8x32xf32>
    %107 = vector.extract_strided_slice %35 {offsets = [0, 24], sizes = [8, 8], strides = [1, 1]} : vector<8x32xbf16> to vector<8x8xbf16>
    %108 = vector.extract_strided_slice %39 {offsets = [0, 24], sizes = [8, 8], strides = [1, 1]} : vector<8x64xbf16> to vector<8x8xbf16>
    %109 = vector.extract_strided_slice %39 {offsets = [0, 56], sizes = [8, 8], strides = [1, 1]} : vector<8x64xbf16> to vector<8x8xbf16>
    %cst_42 = arith.constant dense<0.000000e+00> : vector<8x8xf32>
    %110 = tpu.matmul %107, %108, %cst_42 {dimension_numbers = #tpu.dot_dimension_numbers<[1], [1], [0], [0], [0, 0, 1, 0], [], []>} : vector<8x8xbf16>, vector<8x8xbf16>, vector<8x8xf32> -> vector<8x8xf32>
    %cst_43 = arith.constant -1.000000e+30 : f32
    %111 = vector.broadcast %cst_43 : f32 to vector<8x8xf32>
    %112 = arith.select %38, %110, %111 : vector<8x8xi1>, vector<8x8xf32>
    %cst_44 = arith.constant dense<0xFF800000> : vector<8xf32>
    %113 = vector.multi_reduction <maximumf>, %112, %cst_44 [1] : vector<8x8xf32> to vector<8xf32>
    %114 = vector.shape_cast %113 : vector<8xf32> to vector<8x1xf32>
    %115 = vector.broadcast %114 : vector<8x1xf32> to vector<8x8xf32>
    %116 = arith.subf %112, %115 : vector<8x8xf32>
    %117 = math.exp %116 : vector<8x8xf32>
    %cst_45 = arith.constant dense<0.000000e+00> : vector<8xf32>
    %118 = vector.multi_reduction <add>, %117, %cst_45 [1] : vector<8x8xf32> to vector<8xf32>
    %119 = vector.shape_cast %118 : vector<8xf32> to vector<8x1xf32>
    %120 = tpu.reciprocal %119 {approx = true} : vector<8x1xf32> -> vector<8x1xf32>
    %121 = vector.broadcast %120 : vector<8x1xf32> to vector<8x8xf32>
    %122 = arith.mulf %117, %121 : vector<8x8xf32>
    %123 = arith.truncf %122 : vector<8x8xf32> to vector<8x8xbf16>
    %cst_46 = arith.constant dense<0.000000e+00> : vector<8x8xf32>
    %124 = tpu.matmul %123, %109, %cst_46 {dimension_numbers = #tpu.dot_dimension_numbers<[1], [0], [0], [1], [0, 0, 1, 1], [], []>} : vector<8x8xbf16>, vector<8x8xbf16>, vector<8x8xf32> -> vector<8x8xf32>
    %125 = arith.truncf %124 : vector<8x8xf32> to vector<8x8xbf16>
    %c24 = arith.constant 24 : index
    %c0_47 = arith.constant 0 : index
    %126 = vector.load %arg8[%c24, %c0_47] : memref<32x32xbf16, #tpu.memory_space<vmem>>, vector<8x32xbf16>
    %cst_48 = arith.constant dense<0.000000e+00> : vector<8x32xf32>
    %127 = tpu.matmul %125, %126, %cst_48 {dimension_numbers = #tpu.dot_dimension_numbers<[1], [0], [0], [1], [0, 0, 1, 1], [], []>} : vector<8x8xbf16>, vector<8x32xbf16>, vector<8x32xf32> -> vector<8x32xf32>
    %128 = arith.addf %106, %127 : vector<8x32xf32>
    %c0_49 = arith.constant 0 : index
    %c0_50 = arith.constant 0 : index
    %c0_51 = arith.constant 0 : index
    %129 = vector.load %arg3[%c0_49, %c0_50, %c0_51] : memref<1x8x32xf32, #tpu.memory_space<vmem>>, vector<1x8x32xf32>
    %130 = vector.shape_cast %129 : vector<1x8x32xf32> to vector<8x32xf32>
    %131 = arith.addf %130, %128 : vector<8x32xf32>
    %c0_52 = arith.constant 0 : index
    %c0_53 = arith.constant 0 : index
    %132 = vector.load %arg9[%c0_52, %c0_53] : memref<1x32xf32, #tpu.memory_space<vmem>>, vector<1x32xf32>
    %133 = vector.broadcast %132 : vector<1x32xf32> to vector<8x32xf32>
    %134 = arith.addf %131, %133 : vector<8x32xf32>
    %c0_54 = arith.constant 0 : index
    %c0_55 = arith.constant 0 : index
    %c0_56 = arith.constant 0 : index
    %135 = vector.load %arg10[%c0_54, %c0_55, %c0_56] : memref<1x8x32xf32, #tpu.memory_space<vmem>>, vector<1x8x32xf32>
    %136 = vector.shape_cast %135 : vector<1x8x32xf32> to vector<8x32xf32>
    %137 = vector.shape_cast %134 : vector<8x32xf32> to vector<1x8x32xf32>
    tpu.vector_store %arg10[%c0_54, %c0_55, %c0_56], %137 {strides = array<i32>} : memref<1x8x32xf32, #tpu.memory_space<vmem>>, vector<1x8x32xf32>,
    return
  }
  func.func @transform_0(%arg0: i32, %arg1: i32) -> (i32, i32, i32) {
    %c0_i32 = arith.constant 0 : i32
    %c0_i32_0 = arith.constant 0 : i32
    %c0_i32_1 = arith.constant 0 : i32
    return %arg0, %c0_i32, %c0_i32_0 : i32, i32, i32
  }
  func.func @transform_1(%arg0: i32, %arg1: i32) -> (i32, i32, i32) {
    %c0_i32 = arith.constant 0 : i32
    %c0_i32_0 = arith.constant 0 : i32
    return %arg0, %arg1, %c0_i32 : i32, i32, i32
  }
  func.func @transform_2(%arg0: i32, %arg1: i32) -> (i32, i32) {
    %c0_i32 = arith.constant 0 : i32
    %c0_i32_0 = arith.constant 0 : i32
    %c0_i32_1 = arith.constant 0 : i32
    return %c0_i32, %c0_i32_0 : i32, i32
  }
  func.func @transform_3(%arg0: i32, %arg1: i32) -> (i32, i32) {
    %c0_i32 = arith.constant 0 : i32
    %c0_i32_0 = arith.constant 0 : i32
    %c0_i32_1 = arith.constant 0 : i32
    return %c0_i32, %c0_i32_0 : i32, i32
  }
  func.func @transform_4(%arg0: i32, %arg1: i32) -> (i32, i32) {
    %c0_i32 = arith.constant 0 : i32
    %c0_i32_0 = arith.constant 0 : i32
    %c0_i32_1 = arith.constant 0 : i32
    return %c0_i32, %c0_i32_0 : i32, i32
  }
  func.func @transform_5(%arg0: i32, %arg1: i32) -> (i32, i32) {
    %c0_i32 = arith.constant 0 : i32
    %c0_i32_0 = arith.constant 0 : i32
    %c0_i32_1 = arith.constant 0 : i32
    return %c0_i32, %c0_i32_0 : i32, i32
  }
  func.func @transform_6(%arg0: i32, %arg1: i32) -> (i32, i32) {
    %c0_i32 = arith.constant 0 : i32
    %c0_i32_0 = arith.constant 0 : i32
    %c0_i32_1 = arith.constant 0 : i32
    return %c0_i32, %c0_i32_0 : i32, i32
  }
  func.func @transform_7(%arg0: i32, %arg1: i32) -> (i32, i32) {
    %c0_i32 = arith.constant 0 : i32
    %c0_i32_0 = arith.constant 0 : i32
    %c0_i32_1 = arith.constant 0 : i32
    return %c0_i32, %c0_i32_0 : i32, i32
  }
  func.func @transform_8(%arg0: i32, %arg1: i32) -> (i32, i32, i32) {
    %c0_i32 = arith.constant 0 : i32
    %c0_i32_0 = arith.constant 0 : i32
    return %arg0, %arg1, %c0_i32 : i32, i32, i32
  }
}

module attributes {stable_mosaic.version = 11 : i64} {
  func.func @_ln_mlp_residual_kernel(%arg0: i32, %arg1: memref<16x32xf32, #tpu.memory_space<vmem>>, %arg2: memref<1x32xf32, #tpu.memory_space<vmem>>, %arg3: memref<1x32xf32, #tpu.memory_space<vmem>>, %arg4: memref<32x128xbf16, #tpu.memory_space<vmem>>, %arg5: memref<1x128xf32, #tpu.memory_space<vmem>>, %arg6: memref<128x32xbf16, #tpu.memory_space<vmem>>, %arg7: memref<1x32xf32, #tpu.memory_space<vmem>>, %arg8: memref<16x32xf32, #tpu.memory_space<vmem>>) attributes {dimension_semantics = [#tpu.dimension_semantics<parallel>], iteration_bounds = array<i64: 1>, scalar_prefetch = 0 : i64, scratch_operands = 0 : i64, tpu.core_type = #tpu.core_type<tc>, window_params = [{transform_indices = @transform_0, window_bounds = array<i64: 16, 32>}, {pipeline_mode = #tpu.pipeline_mode<synchronous>, transform_indices = @transform_1, window_bounds = array<i64: 1, 32>}, {pipeline_mode = #tpu.pipeline_mode<synchronous>, transform_indices = @transform_2, window_bounds = array<i64: 1, 32>}, {pipeline_mode = #tpu.pipeline_mode<synchronous>, transform_indices = @transform_3, window_bounds = array<i64: 32, 128>}, {pipeline_mode = #tpu.pipeline_mode<synchronous>, transform_indices = @transform_4, window_bounds = array<i64: 1, 128>}, {pipeline_mode = #tpu.pipeline_mode<synchronous>, transform_indices = @transform_5, window_bounds = array<i64: 128, 32>}, {pipeline_mode = #tpu.pipeline_mode<synchronous>, transform_indices = @transform_6, window_bounds = array<i64: 1, 32>}, {transform_indices = @transform_7, window_bounds = array<i64: 16, 32>}]} {
    %c0 = arith.constant 0 : index
    %c0_0 = arith.constant 0 : index
    %0 = vector.load %arg1[%c0, %c0_0] : memref<16x32xf32, #tpu.memory_space<vmem>>, vector<16x32xf32>
    %c0_1 = arith.constant 0 : index
    %c0_2 = arith.constant 0 : index
    %1 = vector.load %arg2[%c0_1, %c0_2] : memref<1x32xf32, #tpu.memory_space<vmem>>, vector<1x32xf32>
    %c0_3 = arith.constant 0 : index
    %c0_4 = arith.constant 0 : index
    %2 = vector.load %arg3[%c0_3, %c0_4] : memref<1x32xf32, #tpu.memory_space<vmem>>, vector<1x32xf32>
    %cst = arith.constant dense<0.000000e+00> : vector<16xf32>
    %3 = vector.multi_reduction <add>, %0, %cst [1] : vector<16x32xf32> to vector<16xf32>
    %4 = vector.shape_cast %3 : vector<16xf32> to vector<16x1xf32>
    %cst_5 = arith.constant 3.200000e+01 : f32
    %5 = vector.broadcast %cst_5 : f32 to vector<16x1xf32>
    %6 = arith.divf %4, %5 : vector<16x1xf32>
    %7 = vector.broadcast %6 : vector<16x1xf32> to vector<16x32xf32>
    %8 = arith.subf %0, %7 : vector<16x32xf32>
    %9 = arith.mulf %8, %8 : vector<16x32xf32>
    %cst_6 = arith.constant dense<0.000000e+00> : vector<16xf32>
    %10 = vector.multi_reduction <add>, %9, %cst_6 [1] : vector<16x32xf32> to vector<16xf32>
    %11 = vector.shape_cast %10 : vector<16xf32> to vector<16x1xf32>
    %cst_7 = arith.constant 3.200000e+01 : f32
    %12 = vector.broadcast %cst_7 : f32 to vector<16x1xf32>
    %13 = arith.divf %11, %12 : vector<16x1xf32>
    %cst_8 = arith.constant 9.99999997E-7 : f32
    %14 = vector.broadcast %cst_8 : f32 to vector<16x1xf32>
    %15 = arith.addf %13, %14 : vector<16x1xf32>
    %16 = math.rsqrt %15 : vector<16x1xf32>
    %17 = vector.broadcast %16 : vector<16x1xf32> to vector<16x32xf32>
    %18 = arith.mulf %8, %17 : vector<16x32xf32>
    %19 = vector.broadcast %1 : vector<1x32xf32> to vector<16x32xf32>
    %20 = arith.mulf %18, %19 : vector<16x32xf32>
    %21 = vector.broadcast %2 : vector<1x32xf32> to vector<16x32xf32>
    %22 = arith.addf %20, %21 : vector<16x32xf32>
    %23 = arith.truncf %22 : vector<16x32xf32> to vector<16x32xbf16>
    %c0_9 = arith.constant 0 : index
    %c0_10 = arith.constant 0 : index
    %24 = vector.load %arg4[%c0_9, %c0_10] : memref<32x128xbf16, #tpu.memory_space<vmem>>, vector<32x128xbf16>
    %cst_11 = arith.constant dense<0.000000e+00> : vector<16x128xf32>
    %25 = tpu.matmul %23, %24, %cst_11 {dimension_numbers = #tpu.dot_dimension_numbers<[1], [0], [0], [1], [0, 0, 1, 1], [], []>} : vector<16x32xbf16>, vector<32x128xbf16>, vector<16x128xf32> -> vector<16x128xf32>
    %c0_12 = arith.constant 0 : index
    %c0_13 = arith.constant 0 : index
    %26 = vector.load %arg5[%c0_12, %c0_13] : memref<1x128xf32, #tpu.memory_space<vmem>>, vector<1x128xf32>
    %27 = vector.broadcast %26 : vector<1x128xf32> to vector<16x128xf32>
    %28 = arith.addf %25, %27 : vector<16x128xf32>
    %cst_14 = arith.constant 5.000000e-01 : f32
    %29 = vector.broadcast %cst_14 : f32 to vector<16x128xf32>
    %30 = arith.mulf %29, %28 : vector<16x128xf32>
    %cst_15 = arith.constant 0.707106769 : f32
    %31 = vector.broadcast %cst_15 : f32 to vector<16x128xf32>
    %32 = arith.mulf %28, %31 : vector<16x128xf32>
    %33 = math.erf %32 : vector<16x128xf32>
    %cst_16 = arith.constant 1.000000e+00 : f32
    %34 = vector.broadcast %cst_16 : f32 to vector<16x128xf32>
    %35 = arith.addf %34, %33 : vector<16x128xf32>
    %36 = arith.mulf %30, %35 : vector<16x128xf32>
    %37 = arith.truncf %36 : vector<16x128xf32> to vector<16x128xbf16>
    %c0_17 = arith.constant 0 : index
    %c0_18 = arith.constant 0 : index
    %38 = vector.load %arg6[%c0_17, %c0_18] : memref<128x32xbf16, #tpu.memory_space<vmem>>, vector<128x32xbf16>
    %cst_19 = arith.constant dense<0.000000e+00> : vector<16x32xf32>
    %39 = tpu.matmul %37, %38, %cst_19 {dimension_numbers = #tpu.dot_dimension_numbers<[1], [0], [0], [1], [0, 0, 1, 1], [], []>} : vector<16x128xbf16>, vector<128x32xbf16>, vector<16x32xf32> -> vector<16x32xf32>
    %c0_20 = arith.constant 0 : index
    %c0_21 = arith.constant 0 : index
    %40 = vector.load %arg7[%c0_20, %c0_21] : memref<1x32xf32, #tpu.memory_space<vmem>>, vector<1x32xf32>
    %41 = vector.broadcast %40 : vector<1x32xf32> to vector<16x32xf32>
    %42 = arith.addf %39, %41 : vector<16x32xf32>
    %43 = arith.addf %0, %42 : vector<16x32xf32>
    %c0_22 = arith.constant 0 : index
    %c0_23 = arith.constant 0 : index
    %44 = vector.load %arg8[%c0_22, %c0_23] : memref<16x32xf32, #tpu.memory_space<vmem>>, vector<16x32xf32>
    tpu.vector_store %arg8[%c0_22, %c0_23], %43 {strides = array<i32>} : memref<16x32xf32, #tpu.memory_space<vmem>>, vector<16x32xf32>,
    return
  }
  func.func @transform_0(%arg0: i32) -> (i32, i32) {
    %c0_i32 = arith.constant 0 : i32
    %c0_i32_0 = arith.constant 0 : i32
    return %arg0, %c0_i32 : i32, i32
  }
  func.func @transform_1(%arg0: i32) -> (i32, i32) {
    %c0_i32 = arith.constant 0 : i32
    %c0_i32_0 = arith.constant 0 : i32
    %c0_i32_1 = arith.constant 0 : i32
    return %c0_i32, %c0_i32_0 : i32, i32
  }
  func.func @transform_2(%arg0: i32) -> (i32, i32) {
    %c0_i32 = arith.constant 0 : i32
    %c0_i32_0 = arith.constant 0 : i32
    %c0_i32_1 = arith.constant 0 : i32
    return %c0_i32, %c0_i32_0 : i32, i32
  }
  func.func @transform_3(%arg0: i32) -> (i32, i32) {
    %c0_i32 = arith.constant 0 : i32
    %c0_i32_0 = arith.constant 0 : i32
    %c0_i32_1 = arith.constant 0 : i32
    return %c0_i32, %c0_i32_0 : i32, i32
  }
  func.func @transform_4(%arg0: i32) -> (i32, i32) {
    %c0_i32 = arith.constant 0 : i32
    %c0_i32_0 = arith.constant 0 : i32
    %c0_i32_1 = arith.constant 0 : i32
    return %c0_i32, %c0_i32_0 : i32, i32
  }
  func.func @transform_5(%arg0: i32) -> (i32, i32) {
    %c0_i32 = arith.constant 0 : i32
    %c0_i32_0 = arith.constant 0 : i32
    %c0_i32_1 = arith.constant 0 : i32
    return %c0_i32, %c0_i32_0 : i32, i32
  }
  func.func @transform_6(%arg0: i32) -> (i32, i32) {
    %c0_i32 = arith.constant 0 : i32
    %c0_i32_0 = arith.constant 0 : i32
    %c0_i32_1 = arith.constant 0 : i32
    return %c0_i32, %c0_i32_0 : i32, i32
  }
  func.func @transform_7(%arg0: i32) -> (i32, i32) {
    %c0_i32 = arith.constant 0 : i32
    %c0_i32_0 = arith.constant 0 : i32
    return %arg0, %c0_i32 : i32, i32
  }
}

module attributes {stable_mosaic.version = 11 : i64} {
  func.func @_layernorm_kernel(%arg0: i32, %arg1: memref<2x32xf32, #tpu.memory_space<vmem>>, %arg2: memref<1x32xf32, #tpu.memory_space<vmem>>, %arg3: memref<1x32xf32, #tpu.memory_space<vmem>>, %arg4: memref<2x32xf32, #tpu.memory_space<vmem>>) attributes {dimension_semantics = [#tpu.dimension_semantics<parallel>], iteration_bounds = array<i64: 1>, scalar_prefetch = 0 : i64, scratch_operands = 0 : i64, tpu.core_type = #tpu.core_type<tc>, window_params = [{transform_indices = @transform_0, window_bounds = array<i64: 2, 32>}, {pipeline_mode = #tpu.pipeline_mode<synchronous>, transform_indices = @transform_1, window_bounds = array<i64: 1, 32>}, {pipeline_mode = #tpu.pipeline_mode<synchronous>, transform_indices = @transform_2, window_bounds = array<i64: 1, 32>}, {transform_indices = @transform_3, window_bounds = array<i64: 2, 32>}]} {
    %c0 = arith.constant 0 : index
    %c0_0 = arith.constant 0 : index
    %0 = vector.load %arg1[%c0, %c0_0] : memref<2x32xf32, #tpu.memory_space<vmem>>, vector<2x32xf32>
    %c0_1 = arith.constant 0 : index
    %c0_2 = arith.constant 0 : index
    %1 = vector.load %arg2[%c0_1, %c0_2] : memref<1x32xf32, #tpu.memory_space<vmem>>, vector<1x32xf32>
    %c0_3 = arith.constant 0 : index
    %c0_4 = arith.constant 0 : index
    %2 = vector.load %arg3[%c0_3, %c0_4] : memref<1x32xf32, #tpu.memory_space<vmem>>, vector<1x32xf32>
    %cst = arith.constant dense<0.000000e+00> : vector<2xf32>
    %3 = vector.multi_reduction <add>, %0, %cst [1] : vector<2x32xf32> to vector<2xf32>
    %4 = vector.shape_cast %3 : vector<2xf32> to vector<2x1xf32>
    %cst_5 = arith.constant 3.200000e+01 : f32
    %5 = vector.broadcast %cst_5 : f32 to vector<2x1xf32>
    %6 = arith.divf %4, %5 : vector<2x1xf32>
    %7 = vector.broadcast %6 : vector<2x1xf32> to vector<2x32xf32>
    %8 = arith.subf %0, %7 : vector<2x32xf32>
    %9 = arith.mulf %8, %8 : vector<2x32xf32>
    %cst_6 = arith.constant dense<0.000000e+00> : vector<2xf32>
    %10 = vector.multi_reduction <add>, %9, %cst_6 [1] : vector<2x32xf32> to vector<2xf32>
    %11 = vector.shape_cast %10 : vector<2xf32> to vector<2x1xf32>
    %cst_7 = arith.constant 3.200000e+01 : f32
    %12 = vector.broadcast %cst_7 : f32 to vector<2x1xf32>
    %13 = arith.divf %11, %12 : vector<2x1xf32>
    %cst_8 = arith.constant 9.99999997E-7 : f32
    %14 = vector.broadcast %cst_8 : f32 to vector<2x1xf32>
    %15 = arith.addf %13, %14 : vector<2x1xf32>
    %16 = math.rsqrt %15 : vector<2x1xf32>
    %17 = vector.broadcast %16 : vector<2x1xf32> to vector<2x32xf32>
    %18 = arith.mulf %8, %17 : vector<2x32xf32>
    %19 = vector.broadcast %1 : vector<1x32xf32> to vector<2x32xf32>
    %20 = arith.mulf %18, %19 : vector<2x32xf32>
    %21 = vector.broadcast %2 : vector<1x32xf32> to vector<2x32xf32>
    %22 = arith.addf %20, %21 : vector<2x32xf32>
    %c0_9 = arith.constant 0 : index
    %c0_10 = arith.constant 0 : index
    %23 = vector.load %arg4[%c0_9, %c0_10] : memref<2x32xf32, #tpu.memory_space<vmem>>, vector<2x32xf32>
    tpu.vector_store %arg4[%c0_9, %c0_10], %22 {strides = array<i32>} : memref<2x32xf32, #tpu.memory_space<vmem>>, vector<2x32xf32>,
    return
  }
  func.func @transform_0(%arg0: i32) -> (i32, i32) {
    %c0_i32 = arith.constant 0 : i32
    %c0_i32_0 = arith.constant 0 : i32
    return %arg0, %c0_i32 : i32, i32
  }
  func.func @transform_1(%arg0: i32) -> (i32, i32) {
    %c0_i32 = arith.constant 0 : i32
    %c0_i32_0 = arith.constant 0 : i32
    %c0_i32_1 = arith.constant 0 : i32
    return %c0_i32, %c0_i32_0 : i32, i32
  }
  func.func @transform_2(%arg0: i32) -> (i32, i32) {
    %c0_i32 = arith.constant 0 : i32
    %c0_i32_0 = arith.constant 0 : i32
    %c0_i32_1 = arith.constant 0 : i32
    return %c0_i32, %c0_i32_0 : i32, i32
  }
  func.func @transform_3(%arg0: i32) -> (i32, i32) {
    %c0_i32 = arith.constant 0 : i32
    %c0_i32_0 = arith.constant 0 : i32
    return %arg0, %c0_i32 : i32, i32
  }
}

</mosaic_0001>

<llo_original>
// kernel: vit_forward.3
$region0: #{vit_forward.3}
  #allocation0 [shape = 'u32[]', space=smem, size = 0x4, offset = 0x4, fixed_abs, tag = 'smem constant byte address 0x4 - core index']
  #allocation1 [shape = 'u32[144,128]{1,0:T(1,128)}', space=vmem, size = 0x12000, scoped, tag = 'internal scratch']
  %s0 = inlined_call_operand.vmem [shape: f32[2,32], index: 0, kind: input, shape index: {}]
  %s1 = inlined_call_operand.vmem [shape: f32[1,32], index: 1, kind: input, shape index: {}]
  %s2 = inlined_call_operand.vmem [shape: f32[1,32], index: 2, kind: input, shape index: {}]
  %s3 = inlined_call_operand.hbm [shape: f32[2,32], index: 3, kind: output, shape index: {}]
  %s4 = sld [smem:[#allocation0]]
  $region22: #{vit_forward.3} parent=0
    _
  %s6 = ssub.s32 1, %s4
  %s7 = scalar_select 0, %s6, %s4
  $region1: #{vit_forward.3} parent=0
    #allocation2 [shape = 'u8[1024]{0}', space=vmem, size = 0x400, scoped, tag = 'output window, operand 0, single buffered']
    #allocation3 [shape = 's32[1]{0}', space=sflag, size = 0x4, scoped, tag = 'scoped memory for vit_forward.3']
    %8 = vsyncpa [#allocation3], 0
    // Predicated region
    $region2: #{vit_forward.3} parent=1 // pred_check
      _
    $region3: #{vit_forward.3} parent=1 // pred_check_branch
      %10 = sbr.rel (0) target = $region5
    $region4: #{vit_forward.3} parent=1 // pred_region
      _
    $region5: #{vit_forward.3} parent=1 // pred_fallthru
      _
    // Predicated region
    $region6: #{vit_forward.3} parent=1 // pred_check
      _
    $region7: #{vit_forward.3} parent=1 // pred_check_branch
      %12 = sbr.rel (0) target = $region9
    $region8: #{vit_forward.3} parent=1 // pred_region
      _
    $region9: #{vit_forward.3} parent=1 // pred_fallthru
      _
    // Predicated region
    $region10: #{vit_forward.3} parent=1 // pred_check
      _
    $region11: #{vit_forward.3} parent=1 // pred_check_branch
      %14 = sbr.rel (0) target = $region13
    $region12: #{vit_forward.3} parent=1 // pred_region
      _
    $region13: #{vit_forward.3} parent=1 // pred_fallthru
      _
    %v15 = vld [vmem:[%s0] sm:$0x3]
    %v16 = vld [vmem:[%s1] sm:$0x1]
    %v17 = vld [vmem:[%s2] sm:$0x1]
    %vm18 = vcmask 254976
    %v19 = vsel %vm18, %v15, 0.0
    %20 = vadd.xlane.f32.xlu0 %v19
    %v21 = vpop.xlane.xlu0 %20
    %v22 = vrcp.pop 32.0
    %v23 = vmul.f32 %v21, %v22
    %v24 = vsub.f32 %v15, %v23
    %v25 = vmul.f32 %v24, %v24
    %v26 = vsel %vm18, %v25, 0.0
    %27 = vadd.xlane.f32.xlu0 %v26
    %v28 = vpop.xlane.xlu0 %27
    %v29 = vmul.f32 %v28, %v22
    %v30 = vadd.f32 %v29, 1e-06
    %v31 = vrsqrt.pop %v30
    %v32 = vmul.f32 %v24, %v31
    %v34 = vlaneseq
    %v35 = vshrl.u32 %v34, 7
    %v36 = vsub.s32 0, %v35
    %v37 = vrot.slane %v16, %v36
    %v39 = vmul.f32 %v32, %v37
    %v41 = vlaneseq
    %v42 = vshrl.u32 %v41, 7
    %v43 = vsub.s32 0, %v42
    %v44 = vrot.slane %v17, %v43
    %v46 = vadd.f32 %v39, %v44
    %47 = vst.msk [vmem:[#allocation2] sm:$0x3] %vm18, %v46
    // Predicated region
    $region14: #{vit_forward.3} parent=1 // pred_check
      _
    $region15: #{vit_forward.3} parent=1 // pred_check_branch
      %49 = sbr.rel (0) target = $region17
    $region16: #{vit_forward.3} parent=1 // pred_region
      %s51 = ssub.s32 32, 32
      %52 = vsyncadd [#allocation3], %s51
      %s54 = sshll.u32 [#allocation2], 4
      %s55 = int_to_ptr.vmem [resolvable:$true] %s54
      %57 = dma.vmem_to_hbm [thread:$0]  %s55, 32, %s3, [#allocation3]
    $region17: #{vit_forward.3} parent=1 // pred_fallthru
      _
    // Predicated region
    $region18: #{vit_forward.3} parent=1 // pred_check
      _
    $region19: #{vit_forward.3} parent=1 // pred_check_branch
      %59 = sbr.rel (0) target = $region21
    $region20: #{vit_forward.3} parent=1 // pred_region
      %60 = dma.done [#allocation3], 32
    $region21: #{vit_forward.3} parent=1 // pred_fallthru
      _
    %61 = vsyncpa [#allocation3], 1

// kernel: vit_forward.2
$region0: #{vit_forward.2}
  #allocation0 [shape = 'u32[]', space=smem, size = 0x4, offset = 0x4, fixed_abs, tag = 'smem constant byte address 0x4 - core index']
  #allocation1 [shape = 'u32[144,128]{1,0:T(1,128)}', space=vmem, size = 0x12000, scoped, tag = 'internal scratch']
  %s0 = inlined_call_operand.vmem [shape: f32[8,192], index: 0, kind: input, shape index: {}]
  %s1 = inlined_call_operand.vmem [shape: bf16[192,32], index: 1, kind: input, shape index: {}]
  %s2 = inlined_call_operand.vmem [shape: f32[1,32], index: 2, kind: input, shape index: {}]
  %s3 = inlined_call_operand.vmem [shape: f32[8,32], index: 3, kind: output, shape index: {}]
  %s4 = sld [smem:[#allocation0]]
  $region22: #{vit_forward.2} parent=0
    _
  %s6 = ssub.s32 1, %s4
  %s7 = scalar_select 0, %s6, %s4
  // Predicated region
  $region2: #{vit_forward.2} parent=0 // pred_check
    _
  $region3: #{vit_forward.2} parent=0 // pred_check_branch
    %9 = sbr.rel (0) target = $region5
  $region4: #{vit_forward.2} parent=0 // pred_region
    _
  $region5: #{vit_forward.2} parent=0 // pred_fallthru
    _
  // Predicated region
  $region6: #{vit_forward.2} parent=0 // pred_check
    _
  $region7: #{vit_forward.2} parent=0 // pred_check_branch
    %11 = sbr.rel (0) target = $region9
  $region8: #{vit_forward.2} parent=0 // pred_region
    _
  $region9: #{vit_forward.2} parent=0 // pred_fallthru
    _
  // Predicated region
  $region10: #{vit_forward.2} parent=0 // pred_check
    _
  $region11: #{vit_forward.2} parent=0 // pred_check_branch
    %13 = sbr.rel (0) target = $region13
  $region12: #{vit_forward.2} parent=0 // pred_region
    _
  $region13: #{vit_forward.2} parent=0 // pred_fallthru
    _
  %v15 = vld [vmem:[%s0] sm:$0xff]
  %v16 = vld [vmem:[%s0 + $0x8] sm:$0xff]
  %v17 = vpack.c.bf16 %v15, %v15
  %v18 = vpack.c.bf16 %v16, %v16
  %v19 = vld [vmem:[%s1] sm:$0xf]
  %v20 = vld [vmem:[%s1 + $0x4] sm:$0xf]
  %v21 = vld [vmem:[%s1 + $0x8] sm:$0xf]
  %v22 = vld [vmem:[%s1 + $0xc] sm:$0xf]
  %v23 = vld [vmem:[%s1 + $0x10] sm:$0xf]
  %v24 = vld [vmem:[%s1 + $0x14] sm:$0xf]
  %v25 = vld [vmem:[%s1 + $0x18] sm:$0xf]
  %v26 = vld [vmem:[%s1 + $0x1c] sm:$0xf]
  %v27 = vld [vmem:[%s1 + $0x20] sm:$0xf]
  %v28 = vld [vmem:[%s1 + $0x24] sm:$0xf]
  %v29 = vld [vmem:[%s1 + $0x28] sm:$0xf]
  %v30 = vld [vmem:[%s1 + $0x2c] sm:$0xf]
  %v31 = vld [vmem:[%s1 + $0x30] sm:$0xf]
  %v32 = vld [vmem:[%s1 + $0x34] sm:$0xf]
  %v33 = vld [vmem:[%s1 + $0x38] sm:$0xf]
  %v34 = vld [vmem:[%s1 + $0x3c] sm:$0xf]
  %v35 = vld [vmem:[%s1 + $0x40] sm:$0xf]
  %v36 = vld [vmem:[%s1 + $0x44] sm:$0xf]
  %v37 = vld [vmem:[%s1 + $0x48] sm:$0xf]
  %v38 = vld [vmem:[%s1 + $0x4c] sm:$0xf]
  %v39 = vld [vmem:[%s1 + $0x50] sm:$0xf]
  %v40 = vld [vmem:[%s1 + $0x54] sm:$0xf]
  %v41 = vld [vmem:[%s1 + $0x58] sm:$0xf]
  %v42 = vld [vmem:[%s1 + $0x5c] sm:$0xf]
  %v43 = vld [vmem:[%s2] sm:$0x1]
  %v45 = vlaneseq
  %v46 = vshrl.u32 %v45, 7
  %v47 = vsub.s32 0, %v46
  %v48 = vrot.slane %v43, %v47
  %v74 = vunpack.c.l.b16 %v19
  %v75 = vunpack.c.l.b16 %v20
  %v76 = vunpack.c.l.b16 %v21
  %v77 = vunpack.c.l.b16 %v22
  %v78 = vunpack.c.l.b16 %v23
  %v79 = vunpack.c.l.b16 %v24
  %v80 = vunpack.c.l.b16 %v25
  %v81 = vunpack.c.l.b16 %v26
  %v82 = vunpack.c.l.b16 %v27
  %v83 = vunpack.c.l.b16 %v28
  %v84 = vunpack.c.l.b16 %v29
  %v85 = vunpack.c.l.b16 %v30
  %v86 = vunpack.c.l.b16 %v31
  %v87 = vunpack.c.l.b16 %v32
  %v88 = vunpack.c.l.b16 %v33
  %v89 = vunpack.c.l.b16 %v34
  %v90 = vunpack.c.l.b16 %v35
  %v91 = vunpack.c.l.b16 %v36
  %v92 = vunpack.c.l.b16 %v37
  %v93 = vunpack.c.l.b16 %v38
  %v94 = vunpack.c.l.b16 %v39
  %v95 = vunpack.c.l.b16 %v40
  %v96 = vunpack.c.l.b16 %v41
  %v97 = vunpack.c.l.b16 %v42
  %v98 = vpack.c.b16 %v75, %v74
  %v99 = vpack.c.b16 %v77, %v76
  %v100 = vpack.c.b16 %v79, %v78
  %v101 = vpack.c.b16 %v81, %v80
  %v102 = vpack.c.b16 %v83, %v82
  %v103 = vpack.c.b16 %v85, %v84
  %v104 = vpack.c.b16 %v87, %v86
  %v105 = vpack.c.b16 %v89, %v88
  %v106 = vpack.c.b16 %v91, %v90
  %v107 = vpack.c.b16 %v93, %v92
  %v108 = vpack.c.b16 %v95, %v94
  %v109 = vpack.c.b16 %v97, %v96
  %vm122 = vcmask 523264
  %v124 = vsel %vm122, %v18, 0
  %126 = vmatprep.subr.bf16.mxu0 0
  %127 = vmatpush1.bf16.msra.mxu0 %v105
  %128 = vmatprep.subr.bf16.mxu0 0
  %129 = vmatpush1.bf16.msra.mxu0 %v104
  %130 = vmatprep.subr.bf16.mxu0 0
  %131 = vmatpush1.bf16.msra.mxu0 %v103
  %132 = vmatprep.subr.bf16.mxu0 0
  %133 = vmatpush1.bf16.msra.mxu0 %v102
  %134 = vmatprep.subr.bf16.mxu0 0
  %135 = vmatpush1.bf16.msra.mxu0 %v101
  %136 = vmatprep.subr.bf16.mxu0 0
  %137 = vmatpush1.bf16.msra.mxu0 %v100
  %138 = vmatprep.subr.bf16.mxu0 0
  %139 = vmatpush1.bf16.msra.mxu0 %v99
  %140 = vmatprep.subr.bf16.mxu0 0
  %141 = vmatpush1.bf16.msra.mxu0 %v98
  %142 = vmatprep.subr.bf16.mxu0 0
  %143 = vmatpush2.bf16.msra.mxu0 0
  %144 = vmatprep.subr.bf16.mxu0 0
  %145 = vmatpush2.bf16.msra.mxu0 0
  %146 = vmatprep.subr.bf16.mxu0 0
  %147 = vmatpush2.bf16.msra.mxu0 0
  %148 = vmatprep.subr.bf16.mxu0 0
  %149 = vmatpush2.bf16.msra.mxu0 0
  %150 = vmatprep.subr.bf16.mxu0 0
  %151 = vmatpush2.bf16.msra.mxu0 %v109
  %152 = vmatprep.subr.bf16.mxu0 0
  %153 = vmatpush2.bf16.msra.mxu0 %v108
  %154 = vmatprep.subr.bf16.mxu0 0
  %155 = vmatpush2.bf16.msra.mxu0 %v107
  %156 = vmatprep.subr.bf16.mxu0 0
  %157 = vmatpush2.bf16.msra.mxu0 %v106
  %158 = vmatprep.mubr.bf16.mxu0 %v124
  %159 = vmatmul.mubr.bf16.gmra.mxu0 %v17
  %v160 = vpop.f32.mrf.mxu0
  %v161 = vadd.f32 %v48, %v160
  %v162 = vpop.f32.mrf.mxu0
  %v163 = vpop.f32.mrf.mxu0
  %v164 = vpop.f32.mrf.mxu0
  %165 = vdwg.mxu0
  %vm166 = vcmask 261120
  %167 = vst.msk [vmem:[%s3] sm:$0xff] %vm166, %v161
  // Predicated region
  $region14: #{vit_forward.2} parent=0 // pred_check
    _
  $region15: #{vit_forward.2} parent=0 // pred_check_branch
    %169 = sbr.rel (0) target = $region17
  $region16: #{vit_forward.2} parent=0 // pred_region
    _
  $region17: #{vit_forward.2} parent=0 // pred_fallthru
    _
  // Predicated region
  $region18: #{vit_forward.2} parent=0 // pred_check
    _
  $region19: #{vit_forward.2} parent=0 // pred_check_branch
    %171 = sbr.rel (0) target = $region21
  $region20: #{vit_forward.2} parent=0 // pred_region
    _
  $region21: #{vit_forward.2} parent=0 // pred_fallthru
    _

// kernel: closed_call.8
$region0: #{closed_call.8}
  #allocation0 [shape = 'u32[]', space=smem, size = 0x4, offset = 0x4, fixed_abs, tag = 'smem constant byte address 0x4 - core index']
  #allocation1 [shape = 'u32[144,128]{1,0:T(1,128)}', space=vmem, size = 0x12000, scoped, tag = 'internal scratch']
  %s0 = inlined_call_operand.vmem [shape: f32[16,32], index: 0, kind: input, shape index: {}]
  %s1 = inlined_call_operand.vmem [shape: f32[1,32], index: 1, kind: input, shape index: {}]
  %s2 = inlined_call_operand.vmem [shape: f32[1,32], index: 2, kind: input, shape index: {}]
  %s3 = inlined_call_operand.vmem [shape: bf16[32,128], index: 3, kind: input, shape index: {}]
  %s4 = inlined_call_operand.vmem [shape: f32[1,128], index: 4, kind: input, shape index: {}]
  %s5 = inlined_call_operand.vmem [shape: bf16[128,32], index: 5, kind: input, shape index: {}]
  %s6 = inlined_call_operand.vmem [shape: f32[1,32], index: 6, kind: input, shape index: {}]
  %s7 = inlined_call_operand.vmem [shape: f32[16,32], index: 7, kind: output, shape index: {}]
  %s8 = sld [smem:[#allocation0]]
  $region38: #{closed_call.8} parent=0
    _
  %s10 = ssub.s32 1, %s8
  %s11 = scalar_select 0, %s10, %s8
  // Predicated region
  $region2: #{closed_call.8} parent=0 // pred_check
    _
  $region3: #{closed_call.8} parent=0 // pred_check_branch
    %13 = sbr.rel (0) target = $region5
  $region4: #{closed_call.8} parent=0 // pred_region
    _
  $region5: #{closed_call.8} parent=0 // pred_fallthru
    _
  // Predicated region
  $region6: #{closed_call.8} parent=0 // pred_check
    _
  $region7: #{closed_call.8} parent=0 // pred_check_branch
    %15 = sbr.rel (0) target = $region9
  $region8: #{closed_call.8} parent=0 // pred_region
    _
  $region9: #{closed_call.8} parent=0 // pred_fallthru
    _
  // Predicated region
  $region10: #{closed_call.8} parent=0 // pred_check
    _
  $region11: #{closed_call.8} parent=0 // pred_check_branch
    %17 = sbr.rel (0) target = $region13
  $region12: #{closed_call.8} parent=0 // pred_region
    _
  $region13: #{closed_call.8} parent=0 // pred_fallthru
    _
  // Predicated region
  $region14: #{closed_call.8} parent=0 // pred_check
    _
  $region15: #{closed_call.8} parent=0 // pred_check_branch
    %19 = sbr.rel (0) target = $region17
  $region16: #{closed_call.8} parent=0 // pred_region
    _
  $region17: #{closed_call.8} parent=0 // pred_fallthru
    _
  // Predicated region
  $region18: #{closed_call.8} parent=0 // pred_check
    _
  $region19: #{closed_call.8} parent=0 // pred_check_branch
    %21 = sbr.rel (0) target = $region21
  $region20: #{closed_call.8} parent=0 // pred_region
    _
  $region21: #{closed_call.8} parent=0 // pred_fallthru
    _
  // Predicated region
  $region22: #{closed_call.8} parent=0 // pred_check
    _
  $region23: #{closed_call.8} parent=0 // pred_check_branch
    %23 = sbr.rel (0) target = $region25
  $region24: #{closed_call.8} parent=0 // pred_region
    _
  $region25: #{closed_call.8} parent=0 // pred_fallthru
    _
  // Predicated region
  $region26: #{closed_call.8} parent=0 // pred_check
    _
  $region27: #{closed_call.8} parent=0 // pred_check_branch
    %25 = sbr.rel (0) target = $region29
  $region28: #{closed_call.8} parent=0 // pred_region
    _
  $region29: #{closed_call.8} parent=0 // pred_fallthru
    _
  %v27 = vld [vmem:[%s0] sm:$0xff]
  %v28 = vld [vmem:[%s0 + $0x8] sm:$0xff]
  %v29 = vld [vmem:[%s1] sm:$0x1]
  %v30 = vld [vmem:[%s2] sm:$0x1]
  %vm31 = vcmask 261120
  %v32 = vsel %vm31, %v27, 0.0
  %33 = vadd.xlane.f32.xlu0 %v32
  %v34 = vpop.xlane.xlu0 %33
  %v35 = vsel %vm31, %v28, 0.0
  %36 = vadd.xlane.f32.xlu0 %v35
  %v37 = vpop.xlane.xlu0 %36
  %v38 = vrcp.pop 32.0
  %v39 = vmul.f32 %v34, %v38
  %v40 = vmul.f32 %v37, %v38
  %v41 = vsub.f32 %v27, %v39
  %v42 = vsub.f32 %v28, %v40
  %v43 = vmul.f32 %v41, %v41
  %v44 = vmul.f32 %v42, %v42
  %v45 = vsel %vm31, %v43, 0.0
  %46 = vadd.xlane.f32.xlu0 %v45
  %v47 = vpop.xlane.xlu0 %46
  %v48 = vsel %vm31, %v44, 0.0
  %49 = vadd.xlane.f32.xlu0 %v48
  %v50 = vpop.xlane.xlu0 %49
  %v51 = vmul.f32 %v47, %v38
  %v52 = vmul.f32 %v50, %v38
  %v53 = vadd.f32 %v51, 1e-06
  %v54 = vadd.f32 %v52, 1e-06
  %v55 = vrsqrt.pop %v53
  %v56 = vrsqrt.pop %v54
  %v57 = vmul.f32 %v41, %v55
  %v58 = vmul.f32 %v42, %v56
  %v60 = vlaneseq
  %v61 = vshrl.u32 %v60, 7
  %v62 = vsub.s32 0, %v61
  %v63 = vrot.slane %v29, %v62
  %v65 = vmul.f32 %v57, %v63
  %v66 = vmul.f32 %v58, %v63
  %v68 = vlaneseq
  %v69 = vshrl.u32 %v68, 7
  %v70 = vsub.s32 0, %v69
  %v71 = vrot.slane %v30, %v70
  %v73 = vadd.f32 %v65, %v71
  %v74 = vadd.f32 %v66, %v71
  %v75 = vpack.c.bf16 %v74, %v73
  %v76 = vld [vmem:[%s3] sm:$0xf]
  %v77 = vld [vmem:[%s3 + $0x4] sm:$0xf]
  %v78 = vld [vmem:[%s3 + $0x8] sm:$0xf]
  %v79 = vld [vmem:[%s3 + $0xc] sm:$0xf]
  %v80 = vld [vmem:[%s4] sm:$0x1]
  %v82 = vlaneseq
  %v83 = vshrl.u32 %v82, 7
  %v84 = vsub.s32 0, %v83
  %v85 = vrot.slane %v80, %v84
  %v91 = vunpack.c.l.b16 %v76
  %v92 = vunpack.c.l.b16 %v77
  %v93 = vunpack.c.l.b16 %v78
  %v94 = vunpack.c.l.b16 %v79
  %v95 = vpack.c.b16 %v92, %v91
  %v96 = vpack.c.b16 %v94, %v93
  %v100 = vsel %vm31, %v75, 0
  %102 = vmatprep.subr.bf16.mxu0 0
  %103 = vmatpush1.bf16.msra.mxu0 0
  %104 = vmatprep.subr.bf16.mxu0 0
  %105 = vmatpush1.bf16.msra.mxu0 0
  %106 = vmatprep.subr.bf16.mxu0 0
  %107 = vmatpush1.bf16.msra.mxu0 0
  %108 = vmatprep.subr.bf16.mxu0 0
  %109 = vmatpush1.bf16.msra.mxu0 0
  %110 = vmatprep.subr.bf16.mxu0 0
  %111 = vmatpush1.bf16.msra.mxu0 0
  %112 = vmatprep.subr.bf16.mxu0 0
  %113 = vmatpush1.bf16.msra.mxu0 0
  %114 = vmatprep.subr.bf16.mxu0 0
  %115 = vmatpush1.bf16.msra.mxu0 %v96
  %116 = vmatprep.subr.bf16.mxu0 0
  %117 = vmatpush1.bf16.msra.mxu0 %v95
  %118 = vmatprep.subr.bf16.mxu0 0
  %119 = vmatpush2.bf16.msra.mxu0 0
  %120 = vmatprep.subr.bf16.mxu0 0
  %121 = vmatpush2.bf16.msra.mxu0 0
  %122 = vmatprep.subr.bf16.mxu0 0
  %123 = vmatpush2.bf16.msra.mxu0 0
  %124 = vmatprep.subr.bf16.mxu0 0
  %125 = vmatpush2.bf16.msra.mxu0 0
  %126 = vmatprep.subr.bf16.mxu0 0
  %127 = vmatpush2.bf16.msra.mxu0 0
  %128 = vmatprep.subr.bf16.mxu0 0
  %129 = vmatpush2.bf16.msra.mxu0 0
  %130 = vmatprep.subr.bf16.mxu0 0
  %131 = vmatpush2.bf16.msra.mxu0 0
  %132 = vmatprep.subr.bf16.mxu0 0
  %133 = vmatpush2.bf16.msra.mxu0 0
  %134 = vmatprep.mubr.bf16.mxu0 0
  %135 = vmatmul.mubr.bf16.gmra.mxu0 %v100
  %v136 = vpop.f32.mrf.mxu0
  %v137 = vadd.f32 %v85, %v136
  %v138 = vpop.f32.mrf.mxu0
  %v139 = vpop.f32.mrf.mxu0
  %v140 = vadd.f32 %v85, %v139
  %v141 = vpop.f32.mrf.mxu0
  %142 = vdwg.mxu0
  %v143 = vmul.f32 %v137, 0.5
  %v144 = vmul.f32 %v140, 0.5
  %v145 = vmul.f32 %v137, 0.70710677
  %v146 = vmul.f32 %v140, 0.70710677
  %v147 = verf.f32.pop %v145
  %v148 = verf.f32.pop %v146
  %v149 = vadd.f32 %v147, 1.0
  %v150 = vadd.f32 %v148, 1.0
  %v151 = vmul.f32 %v143, %v149
  %v152 = vmul.f32 %v144, %v150
  %v153 = vpack.c.bf16 %v152, %v151
  %v154 = vld [vmem:[%s5] sm:$0xf]
  %v155 = vld [vmem:[%s5 + $0x4] sm:$0xf]
  %v156 = vld [vmem:[%s5 + $0x8] sm:$0xf]
  %v157 = vld [vmem:[%s5 + $0xc] sm:$0xf]
  %v158 = vld [vmem:[%s5 + $0x10] sm:$0xf]
  %v159 = vld [vmem:[%s5 + $0x14] sm:$0xf]
  %v160 = vld [vmem:[%s5 + $0x18] sm:$0xf]
  %v161 = vld [vmem:[%s5 + $0x1c] sm:$0xf]
  %v162 = vld [vmem:[%s5 + $0x20] sm:$0xf]
  %v163 = vld [vmem:[%s5 + $0x24] sm:$0xf]
  %v164 = vld [vmem:[%s5 + $0x28] sm:$0xf]
  %v165 = vld [vmem:[%s5 + $0x2c] sm:$0xf]
  %v166 = vld [vmem:[%s5 + $0x30] sm:$0xf]
  %v167 = vld [vmem:[%s5 + $0x34] sm:$0xf]
  %v168 = vld [vmem:[%s5 + $0x38] sm:$0xf]
  %v169 = vld [vmem:[%s5 + $0x3c] sm:$0xf]
  %v170 = vld [vmem:[%s6] sm:$0x1]
  %v172 = vlaneseq
  %v173 = vshrl.u32 %v172, 7
  %v174 = vsub.s32 0, %v173
  %v175 = vrot.slane %v170, %v174
  %v193 = vunpack.c.l.b16 %v154
  %v194 = vunpack.c.l.b16 %v155
  %v195 = vunpack.c.l.b16 %v156
  %v196 = vunpack.c.l.b16 %v157
  %v197 = vunpack.c.l.b16 %v158
  %v198 = vunpack.c.l.b16 %v159
  %v199 = vunpack.c.l.b16 %v160
  %v200 = vunpack.c.l.b16 %v161
  %v201 = vunpack.c.l.b16 %v162
  %v202 = vunpack.c.l.b16 %v163
  %v203 = vunpack.c.l.b16 %v164
  %v204 = vunpack.c.l.b16 %v165
  %v205 = vunpack.c.l.b16 %v166
  %v206 = vunpack.c.l.b16 %v167
  %v207 = vunpack.c.l.b16 %v168
  %v208 = vunpack.c.l.b16 %v169
  %v209 = vpack.c.b16 %v194, %v193
  %v210 = vpack.c.b16 %v196, %v195
  %v211 = vpack.c.b16 %v198, %v197
  %v212 = vpack.c.b16 %v200, %v199
  %v213 = vpack.c.b16 %v202, %v201
  %v214 = vpack.c.b16 %v204, %v203
  %v215 = vpack.c.b16 %v206, %v205
  %v216 = vpack.c.b16 %v208, %v207
  %225 = vmatprep.subr.bf16.mxu0 0
  %226 = vmatpush1.bf16.msra.mxu0 %v216
  %227 = vmatprep.subr.bf16.mxu0 0
  %228 = vmatpush1.bf16.msra.mxu0 %v215
  %229 = vmatprep.subr.bf16.mxu0 0
  %230 = vmatpush1.bf16.msra.mxu0 %v214
  %231 = vmatprep.subr.bf16.mxu0 0
  %232 = vmatpush1.bf16.msra.mxu0 %v213
  %233 = vmatprep.subr.bf16.mxu0 0
  %234 = vmatpush1.bf16.msra.mxu0 %v212
  %235 = vmatprep.subr.bf16.mxu0 0
  %236 = vmatpush1.bf16.msra.mxu0 %v211
  %237 = vmatprep.subr.bf16.mxu0 0
  %238 = vmatpush1.bf16.msra.mxu0 %v210
  %239 = vmatprep.subr.bf16.mxu0 0
  %240 = vmatpush1.bf16.msra.mxu0 %v209
  %241 = vmatprep.subr.bf16.mxu0 0
  %242 = vmatpush2.bf16.msra.mxu0 0
  %243 = vmatprep.subr.bf16.mxu0 0
  %244 = vmatpush2.bf16.msra.mxu0 0
  %245 = vmatprep.subr.bf16.mxu0 0
  %246 = vmatpush2.bf16.msra.mxu0 0
  %247 = vmatprep.subr.bf16.mxu0 0
  %248 = vmatpush2.bf16.msra.mxu0 0
  %249 = vmatprep.subr.bf16.mxu0 0
  %250 = vmatpush2.bf16.msra.mxu0 0
  %251 = vmatprep.subr.bf16.mxu0 0
  %252 = vmatpush2.bf16.msra.mxu0 0
  %253 = vmatprep.subr.bf16.mxu0 0
  %254 = vmatpush2.bf16.msra.mxu0 0
  %255 = vmatprep.subr.bf16.mxu0 0
  %256 = vmatpush2.bf16.msra.mxu0 0
  %257 = vmatprep.mubr.bf16.mxu0 0
  %258 = vmatmul.mubr.bf16.gmra.mxu0 %v153
  %v259 = vpop.f32.mrf.mxu0
  %v260 = vadd.f32 %v175, %v259
  %v261 = vpop.f32.mrf.mxu0
  %v262 = vpop.f32.mrf.mxu0
  %v263 = vadd.f32 %v175, %v262
  %v264 = vpop.f32.mrf.mxu0
  %265 = vdwg.mxu0
  %v266 = vadd.f32 %v27, %v260
  %v267 = vadd.f32 %v28, %v263
  %268 = vst.msk [vmem:[%s7] sm:$0xff] %vm31, %v266
  %269 = vst.msk [vmem:[%s7 + $0x8] sm:$0xff] %vm31, %v267
  // Predicated region
  $region30: #{closed_call.8} parent=0 // pred_check
    _
  $region31: #{closed_call.8} parent=0 // pred_check_branch
    %271 = sbr.rel (0) target = $region33
  $region32: #{closed_call.8} parent=0 // pred_region
    _
  $region33: #{closed_call.8} parent=0 // pred_fallthru
    _
  // Predicated region
  $region34: #{closed_call.8} parent=0 // pred_check
    _
  $region35: #{closed_call.8} parent=0 // pred_check_branch
    %273 = sbr.rel (0) target = $region37
  $region36: #{closed_call.8} parent=0 // pred_region
    _
  $region37: #{closed_call.8} parent=0 // pred_fallthru
    _

// kernel: closed_call.7
$region0: #{closed_call.7}
  #allocation0 [shape = 'u32[]', space=smem, size = 0x4, offset = 0x4, fixed_abs, tag = 'smem constant byte address 0x4 - core index']
  #allocation1 [shape = 'u32[144,128]{1,0:T(1,128)}', space=vmem, size = 0x12000, scoped, tag = 'internal scratch']
  #allocation2 [shape = 'bf16[8,64]{1,0:T(8,128)(2,1)}', space=vmem, size = 0x800, scoped, tag = 'scratch operand']
  %s0 = inlined_call_operand.vmem [shape: f32[2,8,32], index: 0, kind: input, shape index: {}, may-alias: {0,1}]
  %s1 = inlined_call_operand.vmem [shape: f32[2,8,32], index: 1, kind: input, shape index: {}, may-alias: {0,1}]
  %s2 = inlined_call_operand.vmem [shape: f32[1,32], index: 2, kind: input, shape index: {}]
  %s3 = inlined_call_operand.vmem [shape: f32[1,32], index: 3, kind: input, shape index: {}]
  %s4 = inlined_call_operand.vmem [shape: bf16[32,96], index: 4, kind: input, shape index: {}]
  %s5 = inlined_call_operand.vmem [shape: f32[1,96], index: 5, kind: input, shape index: {}]
  %s6 = inlined_call_operand.vmem [shape: bf16[32,32], index: 6, kind: input, shape index: {}]
  %s7 = inlined_call_operand.vmem [shape: f32[1,32], index: 7, kind: input, shape index: {}]
  %s8 = inlined_call_operand.vmem [shape: f32[2,8,32], index: 8, kind: output, shape index: {}]
  %s9 = sld [smem:[#allocation0]]
  $region69: #{closed_call.7} parent=0
    _
  %s11 = ssub.s32 1, %s9
  %s12 = scalar_select 0, %s11, %s9
  loop: start=0, step=1, limit=4
  $region2: #{closed_call.7} parent=0 // loop_pre_header
    _
  $region3: #{closed_call.7} parent=0 // loop_header
    %s14 = sphi 0, %s18
    %p15 = scmp.ge.s32.totalorder %s14, 4
    %s21 = sphi 0, %s33
    %s22 = sphi 0, %s29
    %s23 = sphi 0, %s21
    %s24 = sphi 0, %s22
    %s25 = sphi 0, %s23
    %s26 = sphi 0, %s24
    %s36 = sphi 0, %s38
    %s39 = sphi 0, %s36
    %s40 = sphi 0, %s39
    %s56 = sphi 0, %s40
    %s64 = sphi 0, %s66
    %s67 = sphi 0, %s64
    %s68 = sphi 0, %s67
    %s84 = sphi 0, %s68
    %s88 = sphi 0, %s88
    %s90 = sphi 0, %s88
    %s91 = sphi 0, %s90
    %s105 = sphi 0, %s91
    %s109 = sphi 0, %s109
    %s111 = sphi 0, %s109
    %s112 = sphi 0, %s111
    %s126 = sphi 0, %s112
    %s130 = sphi 0, %s130
    %s132 = sphi 0, %s130
    %s133 = sphi 0, %s132
    %s147 = sphi 0, %s133
    %s151 = sphi 0, %s151
    %s153 = sphi 0, %s151
    %s154 = sphi 0, %s153
    %s168 = sphi 0, %s154
    %s172 = sphi 0, %s172
    %s174 = sphi 0, %s172
    %s175 = sphi 0, %s174
    %s189 = sphi 0, %s175
    %s193 = sphi 0, %s193
    %s195 = sphi 0, %s193
    %s196 = sphi 0, %s195
    %s210 = sphi 0, %s196
    %s218 = sphi 0, %s220
    %s221 = sphi 0, %s218
    %s222 = sphi 0, %s221
    %s238 = sphi 0, %s222
  $region4: #{closed_call.7} parent=0 // loop_header_branch
    %17 = sbr.rel (%p15) target = $region8
  $region5: #{closed_call.7} parent=0 // loop_body
    %s19 = ssub.s32 %s14, 1
    %s20 = ssub.s32 %s14, 2
    %s27 = sadd.s32 1, %s22
    %p28 = scmp.ge.s32.totalorder %s27, 1
    %s29 = scalar_select %p28, 0, %s27
    %s30 = sadd.s32 1, %s21
    %s31 = scalar_select %p28, %s30, %s21
    %p32 = scmp.ge.s32.totalorder %s31, 2
    %s33 = scalar_select %p32, 0, %s31
    %s34 = ssub.s32 %s21, %s33
    %p35 = scmp.eq.s32.totalorder %s34, 0
    %s37 = sadd.s32 %s36, 1
    %s38 = scalar_select %p35, %s36, %s37
    %p41 = pneg %p35
    %p42 = scmp.eq.s32.totalorder %s14, 1
    %p43 = por %p41, %p42
    %p44 = scmp.ne.s32.totalorder %s36, %s39
    %p45 = scmp.eq.s32.totalorder %s14, 0
    %p46 = por %p44, %p45
    %p47 = scmp.ne.s32.totalorder %s36, %s39
    %p48 = scmp.eq.s32.totalorder %s19, 1
    %p49 = por %p47, %p48
    %p50 = scmp.ne.s32.totalorder %s39, %s40
    %p51 = scmp.eq.s32.totalorder %s19, 0
    %p52 = por %p50, %p51
    %p53 = scmp.ne.s32.totalorder %s39, %s40
    %p54 = scmp.eq.s32.totalorder %s20, 1
    %p55 = por %p53, %p54
    %p57 = scmp.ne.s32.totalorder %s40, %s56
    %p58 = scmp.eq.s32.totalorder %s20, 0
    %p59 = por %p57, %p58
    %s60 = ssub.s32 %s21, %s33
    %s61 = ssub.s32 %s22, %s29
    %s62 = sor.u32 %s60, %s61
    %p63 = scmp.eq.s32.totalorder %s62, 0
    %s65 = sadd.s32 %s64, 1
    %s66 = scalar_select %p63, %s64, %s65
    %p69 = pneg %p63
    %p70 = scmp.eq.s32.totalorder %s14, 1
    %p71 = por %p69, %p70
    %p72 = scmp.ne.s32.totalorder %s64, %s67
    %p73 = scmp.eq.s32.totalorder %s14, 0
    %p74 = por %p72, %p73
    %p75 = scmp.ne.s32.totalorder %s64, %s67
    %p76 = scmp.eq.s32.totalorder %s19, 1
    %p77 = por %p75, %p76
    %p78 = scmp.ne.s32.totalorder %s67, %s68
    %p79 = scmp.eq.s32.totalorder %s19, 0
    %p80 = por %p78, %p79
    %p81 = scmp.ne.s32.totalorder %s67, %s68
    %p82 = scmp.eq.s32.totalorder %s20, 1
    %p83 = por %p81, %p82
    %p85 = scmp.ne.s32.totalorder %s68, %s84
    %p86 = scmp.eq.s32.totalorder %s20, 0
    %p87 = por %p85, %p86
    %s89 = sadd.s32 %s88, 1
    %p92 = scmp.eq.s32.totalorder %s14, 1
    %p93 = scmp.ne.s32.totalorder %s88, %s90
    %p94 = scmp.eq.s32.totalorder %s14, 0
    %p95 = por %p93, %p94
    %p96 = scmp.ne.s32.totalorder %s88, %s90
    %p97 = scmp.eq.s32.totalorder %s19, 1
    %p98 = por %p96, %p97
    %p99 = scmp.ne.s32.totalorder %s90, %s91
    %p100 = scmp.eq.s32.totalorder %s19, 0
    %p101 = por %p99, %p100
    %p102 = scmp.ne.s32.totalorder %s90, %s91
    %p103 = scmp.eq.s32.totalorder %s20, 1
    %p104 = por %p102, %p103
    %p106 = scmp.ne.s32.totalorder %s91, %s105
    %p107 = scmp.eq.s32.totalorder %s20, 0
    %p108 = por %p106, %p107
    %s110 = sadd.s32 %s109, 1
    %p113 = scmp.eq.s32.totalorder %s14, 1
    %p114 = scmp.ne.s32.totalorder %s109, %s111
    %p115 = scmp.eq.s32.totalorder %s14, 0
    %p116 = por %p114, %p115
    %p117 = scmp.ne.s32.totalorder %s109, %s111
    %p118 = scmp.eq.s32.totalorder %s19, 1
    %p119 = por %p117, %p118
    %p120 = scmp.ne.s32.totalorder %s111, %s112
    %p121 = scmp.eq.s32.totalorder %s19, 0
    %p122 = por %p120, %p121
    %p123 = scmp.ne.s32.totalorder %s111, %s112
    %p124 = scmp.eq.s32.totalorder %s20, 1
    %p125 = por %p123, %p124
    %p127 = scmp.ne.s32.totalorder %s112, %s126
    %p128 = scmp.eq.s32.totalorder %s20, 0
    %p129 = por %p127, %p128
    %s131 = sadd.s32 %s130, 1
    %p134 = scmp.eq.s32.totalorder %s14, 1
    %p135 = scmp.ne.s32.totalorder %s130, %s132
    %p136 = scmp.eq.s32.totalorder %s14, 0
    %p137 = por %p135, %p136
    %p138 = scmp.ne.s32.totalorder %s130, %s132
    %p139 = scmp.eq.s32.totalorder %s19, 1
    %p140 = por %p138, %p139
    %p141 = scmp.ne.s32.totalorder %s132, %s133
    %p142 = scmp.eq.s32.totalorder %s19, 0
    %p143 = por %p141, %p142
    %p144 = scmp.ne.s32.totalorder %s132, %s133
    %p145 = scmp.eq.s32.totalorder %s20, 1
    %p146 = por %p144, %p145
    %p148 = scmp.ne.s32.totalorder %s133, %s147
    %p149 = scmp.eq.s32.totalorder %s20, 0
    %p150 = por %p148, %p149
    %s152 = sadd.s32 %s151, 1
    %p155 = scmp.eq.s32.totalorder %s14, 1
    %p156 = scmp.ne.s32.totalorder %s151, %s153
    %p157 = scmp.eq.s32.totalorder %s14, 0
    %p158 = por %p156, %p157
    %p159 = scmp.ne.s32.totalorder %s151, %s153
    %p160 = scmp.eq.s32.totalorder %s19, 1
    %p161 = por %p159, %p160
    %p162 = scmp.ne.s32.totalorder %s153, %s154
    %p163 = scmp.eq.s32.totalorder %s19, 0
    %p164 = por %p162, %p163
    %p165 = scmp.ne.s32.totalorder %s153, %s154
    %p166 = scmp.eq.s32.totalorder %s20, 1
    %p167 = por %p165, %p166
    %p169 = scmp.ne.s32.totalorder %s154, %s168
    %p170 = scmp.eq.s32.totalorder %s20, 0
    %p171 = por %p169, %p170
    %s173 = sadd.s32 %s172, 1
    %p176 = scmp.eq.s32.totalorder %s14, 1
    %p177 = scmp.ne.s32.totalorder %s172, %s174
    %p178 = scmp.eq.s32.totalorder %s14, 0
    %p179 = por %p177, %p178
    %p180 = scmp.ne.s32.totalorder %s172, %s174
    %p181 = scmp.eq.s32.totalorder %s19, 1
    %p182 = por %p180, %p181
    %p183 = scmp.ne.s32.totalorder %s174, %s175
    %p184 = scmp.eq.s32.totalorder %s19, 0
    %p185 = por %p183, %p184
    %p186 = scmp.ne.s32.totalorder %s174, %s175
    %p187 = scmp.eq.s32.totalorder %s20, 1
    %p188 = por %p186, %p187
    %p190 = scmp.ne.s32.totalorder %s175, %s189
    %p191 = scmp.eq.s32.totalorder %s20, 0
    %p192 = por %p190, %p191
    %s194 = sadd.s32 %s193, 1
    %p197 = scmp.eq.s32.totalorder %s14, 1
    %p198 = scmp.ne.s32.totalorder %s193, %s195
    %p199 = scmp.eq.s32.totalorder %s14, 0
    %p200 = por %p198, %p199
    %p201 = scmp.ne.s32.totalorder %s193, %s195
    %p202 = scmp.eq.s32.totalorder %s19, 1
    %p203 = por %p201, %p202
    %p204 = scmp.ne.s32.totalorder %s195, %s196
    %p205 = scmp.eq.s32.totalorder %s19, 0
    %p206 = por %p204, %p205
    %p207 = scmp.ne.s32.totalorder %s195, %s196
    %p208 = scmp.eq.s32.totalorder %s20, 1
    %p209 = por %p207, %p208
    %p211 = scmp.ne.s32.totalorder %s196, %s210
    %p212 = scmp.eq.s32.totalorder %s20, 0
    %p213 = por %p211, %p212
    %s214 = ssub.s32 %s21, %s33
    %s215 = ssub.s32 %s22, %s29
    %s216 = sor.u32 %s214, %s215
    %p217 = scmp.eq.s32.totalorder %s216, 0
    %s219 = sadd.s32 %s218, 1
    %s220 = scalar_select %p217, %s218, %s219
    %p223 = pneg %p217
    %p224 = scmp.eq.s32.totalorder %s14, 1
    %p225 = por %p223, %p224
    %p226 = scmp.ne.s32.totalorder %s218, %s221
    %p227 = scmp.eq.s32.totalorder %s14, 0
    %p228 = por %p226, %p227
    %p229 = scmp.ne.s32.totalorder %s218, %s221
    %p230 = scmp.eq.s32.totalorder %s19, 1
    %p231 = por %p229, %p230
    %p232 = scmp.ne.s32.totalorder %s221, %s222
    %p233 = scmp.eq.s32.totalorder %s19, 0
    %p234 = por %p232, %p233
    %p235 = scmp.ne.s32.totalorder %s221, %s222
    %p236 = scmp.eq.s32.totalorder %s20, 1
    %p237 = por %p235, %p236
    %p239 = scmp.ne.s32.totalorder %s222, %s238
    %p240 = scmp.eq.s32.totalorder %s20, 0
    %p241 = por %p239, %p240
    %p242 = scmp.le.s32.totalorder 1, %s14
    %p243 = scmp.lt.s32.totalorder %s14, 3
    %p244 = pnand %p242, %p243
    %p245 = pneg %p244
    // Predicated region
    $region9: #{closed_call.7} parent=5 // pred_check
      _
    $region10: #{closed_call.7} parent=5 // pred_check_branch
      %247 = sbr.rel (%p244) target = $region12
    $region11: #{closed_call.7} parent=5 // pred_region
      %s248 = ssub.s32 %s14, 1
      // Predicated region
      $region13: #{closed_call.7} parent=11 // pred_check
        %p249 = pneg %p101
      $region14: #{closed_call.7} parent=11 // pred_check_branch
        %251 = sbr.rel (%p249) target = $region16
      $region15: #{closed_call.7} parent=11 // pred_region
        _
      $region16: #{closed_call.7} parent=11 // pred_fallthru
        _
      // Predicated region
      $region17: #{closed_call.7} parent=11 // pred_check
        %p252 = pneg %p122
      $region18: #{closed_call.7} parent=11 // pred_check_branch
        %254 = sbr.rel (%p252) target = $region20
      $region19: #{closed_call.7} parent=11 // pred_region
        _
      $region20: #{closed_call.7} parent=11 // pred_fallthru
        _
      // Predicated region
      $region21: #{closed_call.7} parent=11 // pred_check
        %p255 = pneg %p143
      $region22: #{closed_call.7} parent=11 // pred_check_branch
        %257 = sbr.rel (%p255) target = $region24
      $region23: #{closed_call.7} parent=11 // pred_region
        _
      $region24: #{closed_call.7} parent=11 // pred_fallthru
        _
      // Predicated region
      $region25: #{closed_call.7} parent=11 // pred_check
        %p258 = pneg %p164
      $region26: #{closed_call.7} parent=11 // pred_check_branch
        %260 = sbr.rel (%p258) target = $region28
      $region27: #{closed_call.7} parent=11 // pred_region
        _
      $region28: #{closed_call.7} parent=11 // pred_fallthru
        _
      // Predicated region
      $region29: #{closed_call.7} parent=11 // pred_check
        %p261 = pneg %p185
      $region30: #{closed_call.7} parent=11 // pred_check_branch
        %263 = sbr.rel (%p261) target = $region32
      $region31: #{closed_call.7} parent=11 // pred_region
        _
      $region32: #{closed_call.7} parent=11 // pred_fallthru
        _
      // Predicated region
      $region33: #{closed_call.7} parent=11 // pred_check
        %p264 = pneg %p206
      $region34: #{closed_call.7} parent=11 // pred_check_branch
        %266 = sbr.rel (%p264) target = $region36
      $region35: #{closed_call.7} parent=11 // pred_region
        _
      $region36: #{closed_call.7} parent=11 // pred_fallthru
        _
    $region12: #{closed_call.7} parent=5 // pred_fallthru
      _
    %p267 = scmp.lt.s32.totalorder %s14, 2
    // Predicated region
    $region37: #{closed_call.7} parent=5 // pred_check
      %p268 = pneg %p267
    $region38: #{closed_call.7} parent=5 // pred_check_branch
      %270 = sbr.rel (%p268) target = $region40
    $region39: #{closed_call.7} parent=5 // pred_region
      // Predicated region
      $region41: #{closed_call.7} parent=39 // pred_check
        %p271 = pneg %p46
      $region42: #{closed_call.7} parent=39 // pred_check_branch
        %273 = sbr.rel (%p271) target = $region44
      $region43: #{closed_call.7} parent=39 // pred_region
        %p274 = scmp.lt.s32.totalorder %s21, 1
        %s275 = scalar_select %p274, %s21, 1
        %s276 = smul.addr %s275, 8
        %s277 = scalar_lea.vmem %s0, %s276
      $region44: #{closed_call.7} parent=39 // pred_fallthru
        _
      // Predicated region
      $region45: #{closed_call.7} parent=39 // pred_check
        %p278 = pneg %p74
      $region46: #{closed_call.7} parent=39 // pred_check_branch
        %280 = sbr.rel (%p278) target = $region48
      $region47: #{closed_call.7} parent=39 // pred_region
        %p281 = scmp.lt.s32.totalorder %s21, 1
        %s282 = scalar_select %p281, %s21, 1
        %p283 = scmp.lt.s32.totalorder %s22, 0
        %s284 = scalar_select %p283, %s22, 0
        %s285 = sadd.s32 %s284, %s282
        %s286 = smul.addr %s285, 8
        %s287 = scalar_lea.vmem %s1, %s286
      $region48: #{closed_call.7} parent=39 // pred_fallthru
        _
    $region40: #{closed_call.7} parent=5 // pred_fallthru
      _
    %p288 = scmp.le.s32.totalorder 1, %s14
    %p289 = scmp.lt.s32.totalorder %s14, 3
    %p290 = pnand %p288, %p289
    %p291 = pneg %p290
    // Predicated region
    $region49: #{closed_call.7} parent=5 // pred_check
      _
    $region50: #{closed_call.7} parent=5 // pred_check_branch
      %293 = sbr.rel (%p290) target = $region52
    $region51: #{closed_call.7} parent=5 // pred_region
      %s294 = ssub.s32 %s14, 1
      %p295 = scmp.lt.s32.totalorder %s23, 1
      %s296 = scalar_select %p295, %s23, 1
      %s297 = smul.addr %s296, 8
      %s298 = scalar_lea.vmem %s0, %s297
      %p299 = pneg %p52
      %p300 = pneg %p49
      %p301 = scmp.lt.s32.totalorder %s23, 1
      %s302 = scalar_select %p301, %s23, 1
      %p303 = scmp.lt.s32.totalorder %s24, 0
      %s304 = scalar_select %p303, %s24, 0
      %s305 = sadd.s32 %s304, %s302
      %s306 = smul.addr %s305, 8
      %s307 = scalar_lea.vmem %s1, %s306
      %p308 = pneg %p80
      %p309 = pneg %p77
      %p310 = pneg %p101
      %p311 = pneg %p98
      %p312 = pneg %p122
      %p313 = pneg %p119
      %p314 = pneg %p143
      %p315 = pneg %p140
      %p316 = pneg %p164
      %p317 = pneg %p161
      %p318 = pneg %p185
      %p319 = pneg %p182
      %p320 = pneg %p206
      %p321 = pneg %p203
      %p322 = pneg %p234
      %p323 = pneg %p231
      %p324 = scmp.lt.s32.totalorder %s23, 1
      %s325 = scalar_select %p324, %s23, 1
      %p326 = scmp.lt.s32.totalorder %s24, 0
      %s327 = scalar_select %p326, %s24, 0
      %s328 = sadd.s32 %s327, %s325
      %s329 = smul.addr %s328, 8
      %s330 = scalar_lea.vmem %s8, %s329
      %p331 = scmp.lt.s32.totalorder %s23, 1
      %s332 = scalar_select %p331, %s23, 1
      %s333 = smul.addr %s332, 8
      %s334 = scalar_lea.vmem %s0, %s333
      %p335 = scmp.lt.s32.totalorder %s23, 1
      %s336 = scalar_select %p335, %s23, 1
      %p337 = scmp.lt.s32.totalorder %s24, 0
      %s338 = scalar_select %p337, %s24, 0
      %s339 = sadd.s32 %s338, %s336
      %s340 = smul.addr %s339, 8
      %s341 = scalar_lea.vmem %s1, %s340
      %p342 = scmp.lt.s32.totalorder %s23, 1
      %s343 = scalar_select %p342, %s23, 1
      %p344 = scmp.lt.s32.totalorder %s24, 0
      %s345 = scalar_select %p344, %s24, 0
      %s346 = sadd.s32 %s345, %s343
      %s347 = smul.addr %s346, 8
      %s348 = scalar_lea.vmem %s8, %s347
      %p350 = scmp.eq.s32.totalorder %s24, 0
      // Predicated region
      $region53: #{closed_call.7} parent=51 // pred_check
        %p351 = pneg %p350
      $region54: #{closed_call.7} parent=51 // pred_check_branch
        %353 = sbr.rel (%p351) target = $region56
      $region55: #{closed_call.7} parent=51 // pred_region
        %v354 = vld [vmem:[%s334] sm:$0xff]
        %v355 = vld [vmem:[%s2] sm:$0x1]
        %v356 = vld [vmem:[%s3] sm:$0x1]
        %vm357 = vcmask 261120
        %v358 = vsel %vm357, %v354, 0.0
        %359 = vadd.xlane.f32.xlu0 %v358
        %v360 = vpop.xlane.xlu0 %359
        %v361 = vrcp.pop 32.0
        %v362 = vmul.f32 %v360, %v361
        %v363 = vsub.f32 %v354, %v362
        %v364 = vmul.f32 %v363, %v363
        %v365 = vsel %vm357, %v364, 0.0
        %366 = vadd.xlane.f32.xlu0 %v365
        %v367 = vpop.xlane.xlu0 %366
        %v368 = vmul.f32 %v367, %v361
        %v369 = vadd.f32 %v368, 1e-06
        %v370 = vrsqrt.pop %v369
        %v371 = vmul.f32 %v363, %v370
        %v373 = vlaneseq
        %v374 = vshrl.u32 %v373, 7
        %v375 = vsub.s32 0, %v374
        %v376 = vrot.slane %v355, %v375
        %v378 = vmul.f32 %v371, %v376
        %v380 = vlaneseq
        %v381 = vshrl.u32 %v380, 7
        %v382 = vsub.s32 0, %v381
        %v383 = vrot.slane %v356, %v382
        %v385 = vadd.f32 %v378, %v383
        %v386 = vpack.c.bf16 %v385, %v385
        %v387 = vld [vmem:[%s4] sm:$0xf]
        %v388 = vld [vmem:[%s4 + $0x4] sm:$0xf]
        %v389 = vld [vmem:[%s4 + $0x8] sm:$0xf]
        %v390 = vld [vmem:[%s4 + $0xc] sm:$0xf]
        %v391 = vld [vmem:[%s5] sm:$0x1]
        %v393 = vlaneseq
        %v394 = vshrl.u32 %v393, 7
        %v395 = vsub.s32 0, %v394
        %v396 = vrot.slane %v391, %v395
        %v401 = vunpack.c.l.b16 %v387
        %v402 = vunpack.c.l.b16 %v388
        %v403 = vunpack.c.l.b16 %v389
        %v404 = vunpack.c.l.b16 %v390
        %v405 = vpack.c.b16 %v402, %v401
        %v406 = vpack.c.b16 %v404, %v403
        %407 = vrot.lane.b32.xlu0 %v405, 96
        %v408 = vpop.permute.xlu0 %407
        %409 = vrot.lane.b32.xlu0 %v406, 96
        %v410 = vpop.permute.xlu0 %409
        %413 = vrot.lane.b32.xlu0 %v396, 96
        %v414 = vpop.permute.xlu0 %413
        %v417 = vsel %vm357, %v386, 0
        %419 = vmatprep.subr.bf16.mxu0 0
        %420 = vmatpush1.bf16.msra.mxu0 0
        %421 = vmatprep.subr.bf16.mxu0 0
        %422 = vmatpush1.bf16.msra.mxu0 0
        %423 = vmatprep.subr.bf16.mxu0 0
        %424 = vmatpush1.bf16.msra.mxu0 0
        %425 = vmatprep.subr.bf16.mxu0 0
        %426 = vmatpush1.bf16.msra.mxu0 0
        %427 = vmatprep.subr.bf16.mxu0 0
        %428 = vmatpush1.bf16.msra.mxu0 0
        %429 = vmatprep.subr.bf16.mxu0 0
        %430 = vmatpush1.bf16.msra.mxu0 0
        %431 = vmatprep.subr.bf16.mxu0 0
        %432 = vmatpush1.bf16.msra.mxu0 %v410
        %433 = vmatprep.subr.bf16.mxu0 0
        %434 = vmatpush1.bf16.msra.mxu0 %v408
        %435 = vmatprep.subr.bf16.mxu0 0
        %436 = vmatpush2.bf16.msra.mxu0 0
        %437 = vmatprep.subr.bf16.mxu0 0
        %438 = vmatpush2.bf16.msra.mxu0 0
        %439 = vmatprep.subr.bf16.mxu0 0
        %440 = vmatpush2.bf16.msra.mxu0 0
        %441 = vmatprep.subr.bf16.mxu0 0
        %442 = vmatpush2.bf16.msra.mxu0 0
        %443 = vmatprep.subr.bf16.mxu0 0
        %444 = vmatpush2.bf16.msra.mxu0 0
        %445 = vmatprep.subr.bf16.mxu0 0
        %446 = vmatpush2.bf16.msra.mxu0 0
        %447 = vmatprep.subr.bf16.mxu0 0
        %448 = vmatpush2.bf16.msra.mxu0 0
        %449 = vmatprep.subr.bf16.mxu0 0
        %450 = vmatpush2.bf16.msra.mxu0 0
        %451 = vmatprep.mubr.bf16.mxu0 0
        %452 = vmatmul.mubr.bf16.gmra.mxu0 %v417
        %v453 = vpop.f32.mrf.mxu0
        %v454 = vadd.f32 %v414, %v453
        %v455 = vpop.f32.mrf.mxu0
        %v456 = vpop.f32.mrf.mxu0
        %v457 = vpop.f32.mrf.mxu0
        %458 = vdwg.mxu0
        %v459 = vpack.c.bf16 %v454, %v454
        %vm460 = vcmask 519168
        %461 = vst.msk [vmem:[#allocation2] sm:$0xf] %vm460, %v459
      $region56: #{closed_call.7} parent=51 // pred_fallthru
        _
      %v462 = vld [vmem:[%s341] sm:$0xff]
      %v463 = vld [vmem:[%s2] sm:$0x1]
      %v464 = vld [vmem:[%s3] sm:$0x1]
      %vm465 = vcmask 261120
      %v466 = vsel %vm465, %v462, 0.0
      %467 = vadd.xlane.f32.xlu0 %v466
      %v468 = vpop.xlane.xlu0 %467
      %v469 = vrcp.pop 32.0
      %v470 = vmul.f32 %v468, %v469
      %v471 = vsub.f32 %v462, %v470
      %v472 = vmul.f32 %v471, %v471
      %v473 = vsel %vm465, %v472, 0.0
      %474 = vadd.xlane.f32.xlu0 %v473
      %v475 = vpop.xlane.xlu0 %474
      %v476 = vmul.f32 %v475, %v469
      %v477 = vadd.f32 %v476, 1e-06
      %v478 = vrsqrt.pop %v477
      %v479 = vmul.f32 %v471, %v478
      %v481 = vlaneseq
      %v482 = vshrl.u32 %v481, 7
      %v483 = vsub.s32 0, %v482
      %v484 = vrot.slane %v463, %v483
      %v486 = vmul.f32 %v479, %v484
      %v488 = vlaneseq
      %v489 = vshrl.u32 %v488, 7
      %v490 = vsub.s32 0, %v489
      %v491 = vrot.slane %v464, %v490
      %v493 = vadd.f32 %v486, %v491
      %v494 = vpack.c.bf16 %v493, %v493
      %v495 = vld [vmem:[%s4] sm:$0xf]
      %v496 = vld [vmem:[%s4 + $0x4] sm:$0xf]
      %v497 = vld [vmem:[%s4 + $0x8] sm:$0xf]
      %v498 = vld [vmem:[%s4 + $0xc] sm:$0xf]
      %v499 = vld [vmem:[%s5] sm:$0x1]
      %v501 = vlaneseq
      %v502 = vshrl.u32 %v501, 7
      %v503 = vsub.s32 0, %v502
      %v504 = vrot.slane %v499, %v503
      %v510 = vunpack.c.l.b16 %v495
      %v511 = vunpack.c.l.b16 %v496
      %v512 = vunpack.c.l.b16 %v497
      %v513 = vunpack.c.l.b16 %v498
      %v514 = vpack.c.b16 %v511, %v510
      %v515 = vpack.c.b16 %v513, %v512
      %v519 = vsel %vm465, %v494, 0
      %521 = vmatprep.subr.bf16.mxu0 0
      %522 = vmatpush1.bf16.msra.mxu0 0
      %523 = vmatprep.subr.bf16.mxu0 0
      %524 = vmatpush1.bf16.msra.mxu0 0
      %525 = vmatprep.subr.bf16.mxu0 0
      %526 = vmatpush1.bf16.msra.mxu0 0
      %527 = vmatprep.subr.bf16.mxu0 0
      %528 = vmatpush1.bf16.msra.mxu0 0
      %529 = vmatprep.subr.bf16.mxu0 0
      %530 = vmatpush1.bf16.msra.mxu0 0
      %531 = vmatprep.subr.bf16.mxu0 0
      %532 = vmatpush1.bf16.msra.mxu0 0
      %533 = vmatprep.subr.bf16.mxu0 0
      %534 = vmatpush1.bf16.msra.mxu0 %v515
      %535 = vmatprep.subr.bf16.mxu0 0
      %536 = vmatpush1.bf16.msra.mxu0 %v514
      %537 = vmatprep.subr.bf16.mxu0 0
      %538 = vmatpush2.bf16.msra.mxu0 0
      %539 = vmatprep.subr.bf16.mxu0 0
      %540 = vmatpush2.bf16.msra.mxu0 0
      %541 = vmatprep.subr.bf16.mxu0 0
      %542 = vmatpush2.bf16.msra.mxu0 0
      %543 = vmatprep.subr.bf16.mxu0 0
      %544 = vmatpush2.bf16.msra.mxu0 0
      %545 = vmatprep.subr.bf16.mxu0 0
      %546 = vmatpush2.bf16.msra.mxu0 0
      %547 = vmatprep.subr.bf16.mxu0 0
      %548 = vmatpush2.bf16.msra.mxu0 0
      %549 = vmatprep.subr.bf16.mxu0 0
      %550 = vmatpush2.bf16.msra.mxu0 0
      %551 = vmatprep.subr.bf16.mxu0 0
      %552 = vmatpush2.bf16.msra.mxu0 0
      %553 = vmatprep.mubr.bf16.mxu0 0
      %554 = vmatmul.mubr.bf16.gmra.mxu0 %v519
      %v555 = vpop.f32.mrf.mxu0
      %v556 = vadd.f32 %v504, %v555
      %v557 = vpop.f32.mrf.mxu0
      %v558 = vpop.f32.mrf.mxu0
      %v559 = vpop.f32.mrf.mxu0
      %560 = vdwg.mxu0
      %v561 = vmul.f32 %v556, 0.35355338
      %v562 = vpack.c.bf16 %v561, %v561
      %v563 = vlaneseq
      %v564 = vand.u32 %v563, 127
      %vm565 = vcmp.lt.s32.totalorder %v564, 5
      %v566 = vld [vmem:[#allocation2] sm:$0xf]
      %vm567 = vcmask 64512
      %v569 = vsel %vm567, %v562, 0
      %v572 = vsel %vm567, %v566, 0
      %574 = vmatprep.subr.bf16.mxu0 0
      %575 = vmatpush1.bf16.xpose.msra.mxu0 0
      %576 = vmatprep.subr.bf16.mxu0 0
      %577 = vmatpush1.bf16.xpose.msra.mxu0 0
      %578 = vmatprep.subr.bf16.mxu0 0
      %579 = vmatpush1.bf16.xpose.msra.mxu0 0
      %580 = vmatprep.subr.bf16.mxu0 0
      %581 = vmatpush1.bf16.xpose.msra.mxu0 0
      %582 = vmatprep.subr.bf16.mxu0 0
      %583 = vmatpush1.bf16.xpose.msra.mxu0 0
      %584 = vmatprep.subr.bf16.mxu0 0
      %585 = vmatpush1.bf16.xpose.msra.mxu0 0
      %586 = vmatprep.subr.bf16.mxu0 0
      %587 = vmatpush1.bf16.xpose.msra.mxu0 0
      %588 = vmatprep.subr.bf16.mxu0 0
      %589 = vmatpush1.bf16.xpose.msra.mxu0 %v572
      %590 = vmatprep.subr.bf16.mxu0 0
      %591 = vmatpush2.bf16.xpose.msra.mxu0 0
      %592 = vmatprep.subr.bf16.mxu0 0
      %593 = vmatpush2.bf16.xpose.msra.mxu0 0
      %594 = vmatprep.subr.bf16.mxu0 0
      %595 = vmatpush2.bf16.xpose.msra.mxu0 0
      %596 = vmatprep.subr.bf16.mxu0 0
      %597 = vmatpush2.bf16.xpose.msra.mxu0 0
      %598 = vmatprep.subr.bf16.mxu0 0
      %599 = vmatpush2.bf16.xpose.msra.mxu0 0
      %600 = vmatprep.subr.bf16.mxu0 0
      %601 = vmatpush2.bf16.xpose.msra.mxu0 0
      %602 = vmatprep.subr.bf16.mxu0 0
      %603 = vmatpush2.bf16.xpose.msra.mxu0 0
      %604 = vmatprep.subr.bf16.mxu0 0
      %605 = vmatpush2.bf16.xpose.msra.mxu0 0
      %606 = vmatprep.mubr.bf16.mxu0 0
      %607 = vmatmul.mubr.bf16.gmra.mxu0 %v569
      %v608 = vpop.f32.mrf.mxu0
      %v609 = vadd.f32 0.0, %v608
      %v610 = vpop.f32.mrf.mxu0
      %v611 = vpop.f32.mrf.mxu0
      %v612 = vpop.f32.mrf.mxu0
      %613 = vdwg.mxu0
      %v614 = vsel %vm565, %v609, -1e+30
      %v615 = vsel %vm567, %v614, -inf
      %616 = vmax.xlane.f32.xlu0 %v615
      %v617 = vpop.xlane.xlu0 %616
      %v618 = vsub.f32 %v614, %v617
      %v619 = vmul.f32 %v618, 1.442695
      %v620 = vpow.pop %v619
      %v621 = vsel %vm567, %v620, 0.0
      %622 = vadd.xlane.f32.xlu0 %v621
      %v623 = vpop.xlane.xlu0 %622
      %v624 = vrcp.pop %v623
      %v625 = vmul.f32 %v620, %v624
      %v626 = vpack.c.bf16 %v625, %v625
      %v628 = vunpack.c.l.b16 %v566
      %v629 = vpack.c.b16 %v628, %v628
      %630 = vrot.lane.b32.xlu0 %v629, 96
      %v631 = vpop.permute.xlu0 %630
      %v633 = vsel %vm567, %v626, 0
      %vm635 = vcmask 1043456
      %v637 = vsel %vm635, %v631, 0
      %639 = vmatprep.subr.bf16.mxu0 0
      %640 = vmatpush1.bf16.msra.mxu0 0
      %641 = vmatprep.subr.bf16.mxu0 0
      %642 = vmatpush1.bf16.msra.mxu0 0
      %643 = vmatprep.subr.bf16.mxu0 0
      %644 = vmatpush1.bf16.msra.mxu0 0
      %645 = vmatprep.subr.bf16.mxu0 0
      %646 = vmatpush1.bf16.msra.mxu0 0
      %647 = vmatprep.subr.bf16.mxu0 0
      %648 = vmatpush1.bf16.msra.mxu0 0
      %649 = vmatprep.subr.bf16.mxu0 0
      %650 = vmatpush1.bf16.msra.mxu0 0
      %651 = vmatprep.subr.bf16.mxu0 0
      %652 = vmatpush1.bf16.msra.mxu0 0
      %653 = vmatprep.subr.bf16.mxu0 0
      %654 = vmatpush1.bf16.msra.mxu0 %v637
      %655 = vmatprep.subr.bf16.mxu0 0
      %656 = vmatpush2.bf16.msra.mxu0 0
      %657 = vmatprep.subr.bf16.mxu0 0
      %658 = vmatpush2.bf16.msra.mxu0 0
      %659 = vmatprep.subr.bf16.mxu0 0
      %660 = vmatpush2.bf16.msra.mxu0 0
      %661 = vmatprep.subr.bf16.mxu0 0
      %662 = vmatpush2.bf16.msra.mxu0 0
      %663 = vmatprep.subr.bf16.mxu0 0
      %664 = vmatpush2.bf16.msra.mxu0 0
      %665 = vmatprep.subr.bf16.mxu0 0
      %666 = vmatpush2.bf16.msra.mxu0 0
      %667 = vmatprep.subr.bf16.mxu0 0
      %668 = vmatpush2.bf16.msra.mxu0 0
      %669 = vmatprep.subr.bf16.mxu0 0
      %670 = vmatpush2.bf16.msra.mxu0 0
      %671 = vmatprep.mubr.bf16.mxu0 0
      %672 = vmatmul.mubr.bf16.gmra.mxu0 %v633
      %v673 = vpop.f32.mrf.mxu0
      %v674 = vadd.f32 0.0, %v673
      %v675 = vpop.f32.mrf.mxu0
      %v676 = vpop.f32.mrf.mxu0
      %v677 = vpop.f32.mrf.mxu0
      %678 = vdwg.mxu0
      %v679 = vpack.c.bf16 %v674, %v674
      %v680 = vld [vmem:[%s6] sm:$0xf]
      %682 = vrot.lane.b32.xlu0 %v562, 120
      %v683 = vpop.permute.xlu0 %682
      %684 = vrot.lane.b32.xlu0 %v629, 120
      %v685 = vpop.permute.xlu0 %684
      %v687 = vsel %vm567, %v683, 0
      %v690 = vsel %vm567, %v685, 0
      %692 = vmatprep.subr.bf16.mxu0 0
      %693 = vmatpush1.bf16.xpose.msra.mxu0 0
      %694 = vmatprep.subr.bf16.mxu0 0
      %695 = vmatpush1.bf16.xpose.msra.mxu0 0
      %696 = vmatprep.subr.bf16.mxu0 0
      %697 = vmatpush1.bf16.xpose.msra.mxu0 0
      %698 = vmatprep.subr.bf16.mxu0 0
      %699 = vmatpush1.bf16.xpose.msra.mxu0 0
      %700 = vmatprep.subr.bf16.mxu0 0
      %701 = vmatpush1.bf16.xpose.msra.mxu0 0
      %702 = vmatprep.subr.bf16.mxu0 0
      %703 = vmatpush1.bf16.xpose.msra.mxu0 0
      %704 = vmatprep.subr.bf16.mxu0 0
      %705 = vmatpush1.bf16.xpose.msra.mxu0 0
      %706 = vmatprep.subr.bf16.mxu0 0
      %707 = vmatpush1.bf16.xpose.msra.mxu0 %v690
      %708 = vmatprep.subr.bf16.mxu0 0
      %709 = vmatpush2.bf16.xpose.msra.mxu0 0
      %710 = vmatprep.subr.bf16.mxu0 0
      %711 = vmatpush2.bf16.xpose.msra.mxu0 0
      %712 = vmatprep.subr.bf16.mxu0 0
      %713 = vmatpush2.bf16.xpose.msra.mxu0 0
      %714 = vmatprep.subr.bf16.mxu0 0
      %715 = vmatpush2.bf16.xpose.msra.mxu0 0
      %716 = vmatprep.subr.bf16.mxu0 0
      %717 = vmatpush2.bf16.xpose.msra.mxu0 0
      %718 = vmatprep.subr.bf16.mxu0 0
      %719 = vmatpush2.bf16.xpose.msra.mxu0 0
      %720 = vmatprep.subr.bf16.mxu0 0
      %721 = vmatpush2.bf16.xpose.msra.mxu0 0
      %722 = vmatprep.subr.bf16.mxu0 0
      %723 = vmatpush2.bf16.xpose.msra.mxu0 0
      %724 = vmatprep.mubr.bf16.mxu0 0
      %725 = vmatmul.mubr.bf16.gmra.mxu0 %v687
      %v726 = vpop.f32.mrf.mxu0
      %v727 = vadd.f32 0.0, %v726
      %v728 = vpop.f32.mrf.mxu0
      %v729 = vpop.f32.mrf.mxu0
      %v730 = vpop.f32.mrf.mxu0
      %731 = vdwg.mxu0
      %v732 = vsel %vm565, %v727, -1e+30
      %v733 = vsel %vm567, %v732, -inf
      %734 = vmax.xlane.f32.xlu0 %v733
      %v735 = vpop.xlane.xlu0 %734
      %v736 = vsub.f32 %v732, %v735
      %v737 = vmul.f32 %v736, 1.442695
      %v738 = vpow.pop %v737
      %v739 = vsel %vm567, %v738, 0.0
      %740 = vadd.xlane.f32.xlu0 %v739
      %v741 = vpop.xlane.xlu0 %740
      %v742 = vrcp.pop %v741
      %v743 = vmul.f32 %v738, %v742
      %v744 = vpack.c.bf16 %v743, %v743
      %745 = vrot.lane.b32.xlu0 %v629, 88
      %v746 = vpop.permute.xlu0 %745
      %v748 = vsel %vm567, %v744, 0
      %v751 = vsel %vm635, %v746, 0
      %753 = vmatprep.subr.bf16.mxu0 0
      %754 = vmatpush1.bf16.msra.mxu0 0
      %755 = vmatprep.subr.bf16.mxu0 0
      %756 = vmatpush1.bf16.msra.mxu0 0
      %757 = vmatprep.subr.bf16.mxu0 0
      %758 = vmatpush1.bf16.msra.mxu0 0
      %759 = vmatprep.subr.bf16.mxu0 0
      %760 = vmatpush1.bf16.msra.mxu0 0
      %761 = vmatprep.subr.bf16.mxu0 0
      %762 = vmatpush1.bf16.msra.mxu0 0
      %763 = vmatprep.subr.bf16.mxu0 0
      %764 = vmatpush1.bf16.msra.mxu0 0
      %765 = vmatprep.subr.bf16.mxu0 0
      %766 = vmatpush1.bf16.msra.mxu0 0
      %767 = vmatprep.subr.bf16.mxu0 0
      %768 = vmatpush1.bf16.msra.mxu0 %v751
      %769 = vmatprep.subr.bf16.mxu0 0
      %770 = vmatpush2.bf16.msra.mxu0 0
      %771 = vmatprep.subr.bf16.mxu0 0
      %772 = vmatpush2.bf16.msra.mxu0 0
      %773 = vmatprep.subr.bf16.mxu0 0
      %774 = vmatpush2.bf16.msra.mxu0 0
      %775 = vmatprep.subr.bf16.mxu0 0
      %776 = vmatpush2.bf16.msra.mxu0 0
      %777 = vmatprep.subr.bf16.mxu0 0
      %778 = vmatpush2.bf16.msra.mxu0 0
      %779 = vmatprep.subr.bf16.mxu0 0
      %780 = vmatpush2.bf16.msra.mxu0 0
      %781 = vmatprep.subr.bf16.mxu0 0
      %782 = vmatpush2.bf16.msra.mxu0 0
      %783 = vmatprep.subr.bf16.mxu0 0
      %784 = vmatpush2.bf16.msra.mxu0 0
      %785 = vmatprep.mubr.bf16.mxu0 0
      %786 = vmatmul.mubr.bf16.gmra.mxu0 %v748
      %v787 = vpop.f32.mrf.mxu0
      %v788 = vadd.f32 0.0, %v787
      %v789 = vpop.f32.mrf.mxu0
      %v790 = vpop.f32.mrf.mxu0
      %v791 = vpop.f32.mrf.mxu0
      %792 = vdwg.mxu0
      %v793 = vpack.c.bf16 %v788, %v788
      %v794 = vld [vmem:[%s6 + $0x4] sm:$0xf]
      %v796 = vsel %vm567, %v793, 0
      %v799 = vsel %vm635, %v794, 0
      %801 = vmatprep.subr.bf16.mxu0 0
      %802 = vmatpush1.bf16.msra.mxu0 0
      %803 = vmatprep.subr.bf16.mxu0 0
      %804 = vmatpush1.bf16.msra.mxu0 0
      %805 = vmatprep.subr.bf16.mxu0 0
      %806 = vmatpush1.bf16.msra.mxu0 0
      %807 = vmatprep.subr.bf16.mxu0 0
      %808 = vmatpush1.bf16.msra.mxu0 0
      %809 = vmatprep.subr.bf16.mxu0 0
      %810 = vmatpush1.bf16.msra.mxu0 0
      %811 = vmatprep.subr.bf16.mxu0 0
      %812 = vmatpush1.bf16.msra.mxu0 0
      %813 = vmatprep.subr.bf16.mxu0 0
      %814 = vmatpush1.bf16.msra.mxu0 0
      %815 = vmatprep.subr.bf16.mxu0 0
      %816 = vmatpush1.bf16.msra.mxu0 %v799
      %817 = vmatprep.subr.bf16.mxu0 0
      %818 = vmatpush2.bf16.msra.mxu0 0
      %819 = vmatprep.subr.bf16.mxu0 0
      %820 = vmatpush2.bf16.msra.mxu0 0
      %821 = vmatprep.subr.bf16.mxu0 0
      %822 = vmatpush2.bf16.msra.mxu0 0
      %823 = vmatprep.subr.bf16.mxu0 0
      %824 = vmatpush2.bf16.msra.mxu0 0
      %825 = vmatprep.subr.bf16.mxu0 0
      %826 = vmatpush2.bf16.msra.mxu0 0
      %827 = vmatprep.subr.bf16.mxu0 0
      %828 = vmatpush2.bf16.msra.mxu0 0
      %829 = vmatprep.subr.bf16.mxu0 0
      %830 = vmatpush2.bf16.msra.mxu0 0
      %831 = vmatprep.subr.bf16.mxu0 0
      %832 = vmatpush2.bf16.msra.mxu0 0
      %833 = vmatprep.mubr.bf16.mxu0 0
      %834 = vmatmul.mubr.bf16.gmra.mxu0 %v796
      %v835 = vpop.f32.mrf.mxu0
      %v836 = vadd.f32 0.0, %v835
      %v837 = vpop.f32.mrf.mxu0
      %v838 = vpop.f32.mrf.mxu0
      %v839 = vpop.f32.mrf.mxu0
      %840 = vdwg.mxu0
      %v842 = vsel %vm567, %v679, 0
      %v845 = vsel %vm635, %v680, 0
      %847 = vmatprep.subr.bf16.mxu0 0
      %848 = vmatpush1.bf16.msra.mxu0 0
      %849 = vmatprep.subr.bf16.mxu0 0
      %850 = vmatpush1.bf16.msra.mxu0 0
      %851 = vmatprep.subr.bf16.mxu0 0
      %852 = vmatpush1.bf16.msra.mxu0 0
      %853 = vmatprep.subr.bf16.mxu0 0
      %854 = vmatpush1.bf16.msra.mxu0 0
      %855 = vmatprep.subr.bf16.mxu0 0
      %856 = vmatpush1.bf16.msra.mxu0 0
      %857 = vmatprep.subr.bf16.mxu0 0
      %858 = vmatpush1.bf16.msra.mxu0 0
      %859 = vmatprep.subr.bf16.mxu0 0
      %860 = vmatpush1.bf16.msra.mxu0 0
      %861 = vmatprep.subr.bf16.mxu0 0
      %862 = vmatpush1.bf16.msra.mxu0 %v845
      %863 = vmatprep.subr.bf16.mxu0 0
      %864 = vmatpush2.bf16.msra.mxu0 0
      %865 = vmatprep.subr.bf16.mxu0 0
      %866 = vmatpush2.bf16.msra.mxu0 0
      %867 = vmatprep.subr.bf16.mxu0 0
      %868 = vmatpush2.bf16.msra.mxu0 0
      %869 = vmatprep.subr.bf16.mxu0 0
      %870 = vmatpush2.bf16.msra.mxu0 0
      %871 = vmatprep.subr.bf16.mxu0 0
      %872 = vmatpush2.bf16.msra.mxu0 0
      %873 = vmatprep.subr.bf16.mxu0 0
      %874 = vmatpush2.bf16.msra.mxu0 0
      %875 = vmatprep.subr.bf16.mxu0 0
      %876 = vmatpush2.bf16.msra.mxu0 0
      %877 = vmatprep.subr.bf16.mxu0 0
      %878 = vmatpush2.bf16.msra.mxu0 0
      %879 = vmatprep.mubr.bf16.mxu0 0
      %880 = vmatmul.mubr.bf16.gmra.mxu0 %v842
      %v881 = vpop.f32.mrf.mxu0
      %v882 = vadd.f32 %v836, %v881
      %v883 = vpop.f32.mrf.mxu0
      %v884 = vpop.f32.mrf.mxu0
      %v885 = vpop.f32.mrf.mxu0
      %886 = vdwg.mxu0
      %887 = vrot.lane.b32.xlu0 %v562, 112
      %v888 = vpop.permute.xlu0 %887
      %889 = vrot.lane.b32.xlu0 %v629, 112
      %v890 = vpop.permute.xlu0 %889
      %v892 = vsel %vm567, %v888, 0
      %v895 = vsel %vm567, %v890, 0
      %897 = vmatprep.subr.bf16.mxu0 0
      %898 = vmatpush1.bf16.xpose.msra.mxu0 0
      %899 = vmatprep.subr.bf16.mxu0 0
      %900 = vmatpush1.bf16.xpose.msra.mxu0 0
      %901 = vmatprep.subr.bf16.mxu0 0
      %902 = vmatpush1.bf16.xpose.msra.mxu0 0
      %903 = vmatprep.subr.bf16.mxu0 0
      %904 = vmatpush1.bf16.xpose.msra.mxu0 0
      %905 = vmatprep.subr.bf16.mxu0 0
      %906 = vmatpush1.bf16.xpose.msra.mxu0 0
      %907 = vmatprep.subr.bf16.mxu0 0
      %908 = vmatpush1.bf16.xpose.msra.mxu0 0
      %909 = vmatprep.subr.bf16.mxu0 0
      %910 = vmatpush1.bf16.xpose.msra.mxu0 0
      %911 = vmatprep.subr.bf16.mxu0 0
      %912 = vmatpush1.bf16.xpose.msra.mxu0 %v895
      %913 = vmatprep.subr.bf16.mxu0 0
      %914 = vmatpush2.bf16.xpose.msra.mxu0 0
      %915 = vmatprep.subr.bf16.mxu0 0
      %916 = vmatpush2.bf16.xpose.msra.mxu0 0
      %917 = vmatprep.subr.bf16.mxu0 0
      %918 = vmatpush2.bf16.xpose.msra.mxu0 0
      %919 = vmatprep.subr.bf16.mxu0 0
      %920 = vmatpush2.bf16.xpose.msra.mxu0 0
      %921 = vmatprep.subr.bf16.mxu0 0
      %922 = vmatpush2.bf16.xpose.msra.mxu0 0
      %923 = vmatprep.subr.bf16.mxu0 0
      %924 = vmatpush2.bf16.xpose.msra.mxu0 0
      %925 = vmatprep.subr.bf16.mxu0 0
      %926 = vmatpush2.bf16.xpose.msra.mxu0 0
      %927 = vmatprep.subr.bf16.mxu0 0
      %928 = vmatpush2.bf16.xpose.msra.mxu0 0
      %929 = vmatprep.mubr.bf16.mxu0 0
      %930 = vmatmul.mubr.bf16.gmra.mxu0 %v892
      %v931 = vpop.f32.mrf.mxu0
      %v932 = vadd.f32 0.0, %v931
      %v933 = vpop.f32.mrf.mxu0
      %v934 = vpop.f32.mrf.mxu0
      %v935 = vpop.f32.mrf.mxu0
      %936 = vdwg.mxu0
      %v937 = vsel %vm565, %v932, -1e+30
      %v938 = vsel %vm567, %v937, -inf
      %939 = vmax.xlane.f32.xlu0 %v938
      %v940 = vpop.xlane.xlu0 %939
      %v941 = vsub.f32 %v937, %v940
      %v942 = vmul.f32 %v941, 1.442695
      %v943 = vpow.pop %v942
      %v944 = vsel %vm567, %v943, 0.0
      %945 = vadd.xlane.f32.xlu0 %v944
      %v946 = vpop.xlane.xlu0 %945
      %v947 = vrcp.pop %v946
      %v948 = vmul.f32 %v943, %v947
      %v949 = vpack.c.bf16 %v948, %v948
      %950 = vrot.lane.b32.xlu0 %v629, 80
      %v951 = vpop.permute.xlu0 %950
      %v953 = vsel %vm567, %v949, 0
      %v956 = vsel %vm635, %v951, 0
      %958 = vmatprep.subr.bf16.mxu0 0
      %959 = vmatpush1.bf16.msra.mxu0 0
      %960 = vmatprep.subr.bf16.mxu0 0
      %961 = vmatpush1.bf16.msra.mxu0 0
      %962 = vmatprep.subr.bf16.mxu0 0
      %963 = vmatpush1.bf16.msra.mxu0 0
      %964 = vmatprep.subr.bf16.mxu0 0
      %965 = vmatpush1.bf16.msra.mxu0 0
      %966 = vmatprep.subr.bf16.mxu0 0
      %967 = vmatpush1.bf16.msra.mxu0 0
      %968 = vmatprep.subr.bf16.mxu0 0
      %969 = vmatpush1.bf16.msra.mxu0 0
      %970 = vmatprep.subr.bf16.mxu0 0
      %971 = vmatpush1.bf16.msra.mxu0 0
      %972 = vmatprep.subr.bf16.mxu0 0
      %973 = vmatpush1.bf16.msra.mxu0 %v956
      %974 = vmatprep.subr.bf16.mxu0 0
      %975 = vmatpush2.bf16.msra.mxu0 0
      %976 = vmatprep.subr.bf16.mxu0 0
      %977 = vmatpush2.bf16.msra.mxu0 0
      %978 = vmatprep.subr.bf16.mxu0 0
      %979 = vmatpush2.bf16.msra.mxu0 0
      %980 = vmatprep.subr.bf16.mxu0 0
      %981 = vmatpush2.bf16.msra.mxu0 0
      %982 = vmatprep.subr.bf16.mxu0 0
      %983 = vmatpush2.bf16.msra.mxu0 0
      %984 = vmatprep.subr.bf16.mxu0 0
      %985 = vmatpush2.bf16.msra.mxu0 0
      %986 = vmatprep.subr.bf16.mxu0 0
      %987 = vmatpush2.bf16.msra.mxu0 0
      %988 = vmatprep.subr.bf16.mxu0 0
      %989 = vmatpush2.bf16.msra.mxu0 0
      %990 = vmatprep.mubr.bf16.mxu0 0
      %991 = vmatmul.mubr.bf16.gmra.mxu0 %v953
      %v992 = vpop.f32.mrf.mxu0
      %v993 = vadd.f32 0.0, %v992
      %v994 = vpop.f32.mrf.mxu0
      %v995 = vpop.f32.mrf.mxu0
      %v996 = vpop.f32.mrf.mxu0
      %997 = vdwg.mxu0
      %v998 = vpack.c.bf16 %v993, %v993
      %v999 = vld [vmem:[%s6 + $0x8] sm:$0xf]
      %v1001 = vsel %vm567, %v998, 0
      %v1004 = vsel %vm635, %v999, 0
      %1006 = vmatprep.subr.bf16.mxu0 0
      %1007 = vmatpush1.bf16.msra.mxu0 0
      %1008 = vmatprep.subr.bf16.mxu0 0
      %1009 = vmatpush1.bf16.msra.mxu0 0
      %1010 = vmatprep.subr.bf16.mxu0 0
      %1011 = vmatpush1.bf16.msra.mxu0 0
      %1012 = vmatprep.subr.bf16.mxu0 0
      %1013 = vmatpush1.bf16.msra.mxu0 0
      %1014 = vmatprep.subr.bf16.mxu0 0
      %1015 = vmatpush1.bf16.msra.mxu0 0
      %1016 = vmatprep.subr.bf16.mxu0 0
      %1017 = vmatpush1.bf16.msra.mxu0 0
      %1018 = vmatprep.subr.bf16.mxu0 0
      %1019 = vmatpush1.bf16.msra.mxu0 0
      %1020 = vmatprep.subr.bf16.mxu0 0
      %1021 = vmatpush1.bf16.msra.mxu0 %v1004
      %1022 = vmatprep.subr.bf16.mxu0 0
      %1023 = vmatpush2.bf16.msra.mxu0 0
      %1024 = vmatprep.subr.bf16.mxu0 0
      %1025 = vmatpush2.bf16.msra.mxu0 0
      %1026 = vmatprep.subr.bf16.mxu0 0
      %1027 = vmatpush2.bf16.msra.mxu0 0
      %1028 = vmatprep.subr.bf16.mxu0 0
      %1029 = vmatpush2.bf16.msra.mxu0 0
      %1030 = vmatprep.subr.bf16.mxu0 0
      %1031 = vmatpush2.bf16.msra.mxu0 0
      %1032 = vmatprep.subr.bf16.mxu0 0
      %1033 = vmatpush2.bf16.msra.mxu0 0
      %1034 = vmatprep.subr.bf16.mxu0 0
      %1035 = vmatpush2.bf16.msra.mxu0 0
      %1036 = vmatprep.subr.bf16.mxu0 0
      %1037 = vmatpush2.bf16.msra.mxu0 0
      %1038 = vmatprep.mubr.bf16.mxu0 0
      %1039 = vmatmul.mubr.bf16.gmra.mxu0 %v1001
      %v1040 = vpop.f32.mrf.mxu0
      %v1041 = vadd.f32 0.0, %v1040
      %v1042 = vpop.f32.mrf.mxu0
      %v1043 = vpop.f32.mrf.mxu0
      %v1044 = vpop.f32.mrf.mxu0
      %1045 = vdwg.mxu0
      %v1046 = vadd.f32 %v882, %v1041
      %1047 = vrot.lane.b32.xlu0 %v562, 104
      %v1048 = vpop.permute.xlu0 %1047
      %1049 = vrot.lane.b32.xlu0 %v629, 104
      %v1050 = vpop.permute.xlu0 %1049
      %v1052 = vsel %vm567, %v1048, 0
      %v1055 = vsel %vm567, %v1050, 0
      %1057 = vmatprep.subr.bf16.mxu0 0
      %1058 = vmatpush1.bf16.xpose.msra.mxu0 0
      %1059 = vmatprep.subr.bf16.mxu0 0
      %1060 = vmatpush1.bf16.xpose.msra.mxu0 0
      %1061 = vmatprep.subr.bf16.mxu0 0
      %1062 = vmatpush1.bf16.xpose.msra.mxu0 0
      %1063 = vmatprep.subr.bf16.mxu0 0
      %1064 = vmatpush1.bf16.xpose.msra.mxu0 0
      %1065 = vmatprep.subr.bf16.mxu0 0
      %1066 = vmatpush1.bf16.xpose.msra.mxu0 0
      %1067 = vmatprep.subr.bf16.mxu0 0
      %1068 = vmatpush1.bf16.xpose.msra.mxu0 0
      %1069 = vmatprep.subr.bf16.mxu0 0
      %1070 = vmatpush1.bf16.xpose.msra.mxu0 0
      %1071 = vmatprep.subr.bf16.mxu0 0
      %1072 = vmatpush1.bf16.xpose.msra.mxu0 %v1055
      %1073 = vmatprep.subr.bf16.mxu0 0
      %1074 = vmatpush2.bf16.xpose.msra.mxu0 0
      %1075 = vmatprep.subr.bf16.mxu0 0
      %1076 = vmatpush2.bf16.xpose.msra.mxu0 0
      %1077 = vmatprep.subr.bf16.mxu0 0
      %1078 = vmatpush2.bf16.xpose.msra.mxu0 0
      %1079 = vmatprep.subr.bf16.mxu0 0
      %1080 = vmatpush2.bf16.xpose.msra.mxu0 0
      %1081 = vmatprep.subr.bf16.mxu0 0
      %1082 = vmatpush2.bf16.xpose.msra.mxu0 0
      %1083 = vmatprep.subr.bf16.mxu0 0
      %1084 = vmatpush2.bf16.xpose.msra.mxu0 0
      %1085 = vmatprep.subr.bf16.mxu0 0
      %1086 = vmatpush2.bf16.xpose.msra.mxu0 0
      %1087 = vmatprep.subr.bf16.mxu0 0
      %1088 = vmatpush2.bf16.xpose.msra.mxu0 0
      %1089 = vmatprep.mubr.bf16.mxu0 0
      %1090 = vmatmul.mubr.bf16.gmra.mxu0 %v1052
      %v1091 = vpop.f32.mrf.mxu0
      %v1092 = vadd.f32 0.0, %v1091
      %v1093 = vpop.f32.mrf.mxu0
      %v1094 = vpop.f32.mrf.mxu0
      %v1095 = vpop.f32.mrf.mxu0
      %1096 = vdwg.mxu0
      %v1097 = vsel %vm565, %v1092, -1e+30
      %v1098 = vsel %vm567, %v1097, -inf
      %1099 = vmax.xlane.f32.xlu0 %v1098
      %v1100 = vpop.xlane.xlu0 %1099
      %v1101 = vsub.f32 %v1097, %v1100
      %v1102 = vmul.f32 %v1101, 1.442695
      %v1103 = vpow.pop %v1102
      %v1104 = vsel %vm567, %v1103, 0.0
      %1105 = vadd.xlane.f32.xlu0 %v1104
      %v1106 = vpop.xlane.xlu0 %1105
      %v1107 = vrcp.pop %v1106
      %v1108 = vmul.f32 %v1103, %v1107
      %v1109 = vpack.c.bf16 %v1108, %v1108
      %1110 = vrot.lane.b32.xlu0 %v629, 72
      %v1111 = vpop.permute.xlu0 %1110
      %v1113 = vsel %vm567, %v1109, 0
      %v1116 = vsel %vm635, %v1111, 0
      %1118 = vmatprep.subr.bf16.mxu0 0
      %1119 = vmatpush1.bf16.msra.mxu0 0
      %1120 = vmatprep.subr.bf16.mxu0 0
      %1121 = vmatpush1.bf16.msra.mxu0 0
      %1122 = vmatprep.subr.bf16.mxu0 0
      %1123 = vmatpush1.bf16.msra.mxu0 0
      %1124 = vmatprep.subr.bf16.mxu0 0
      %1125 = vmatpush1.bf16.msra.mxu0 0
      %1126 = vmatprep.subr.bf16.mxu0 0
      %1127 = vmatpush1.bf16.msra.mxu0 0
      %1128 = vmatprep.subr.bf16.mxu0 0
      %1129 = vmatpush1.bf16.msra.mxu0 0
      %1130 = vmatprep.subr.bf16.mxu0 0
      %1131 = vmatpush1.bf16.msra.mxu0 0
      %1132 = vmatprep.subr.bf16.mxu0 0
      %1133 = vmatpush1.bf16.msra.mxu0 %v1116
      %1134 = vmatprep.subr.bf16.mxu0 0
      %1135 = vmatpush2.bf16.msra.mxu0 0
      %1136 = vmatprep.subr.bf16.mxu0 0
      %1137 = vmatpush2.bf16.msra.mxu0 0
      %1138 = vmatprep.subr.bf16.mxu0 0
      %1139 = vmatpush2.bf16.msra.mxu0 0
      %1140 = vmatprep.subr.bf16.mxu0 0
      %1141 = vmatpush2.bf16.msra.mxu0 0
      %1142 = vmatprep.subr.bf16.mxu0 0
      %1143 = vmatpush2.bf16.msra.mxu0 0
      %1144 = vmatprep.subr.bf16.mxu0 0
      %1145 = vmatpush2.bf16.msra.mxu0 0
      %1146 = vmatprep.subr.bf16.mxu0 0
      %1147 = vmatpush2.bf16.msra.mxu0 0
      %1148 = vmatprep.subr.bf16.mxu0 0
      %1149 = vmatpush2.bf16.msra.mxu0 0
      %1150 = vmatprep.mubr.bf16.mxu0 0
      %1151 = vmatmul.mubr.bf16.gmra.mxu0 %v1113
      %v1152 = vpop.f32.mrf.mxu0
      %v1153 = vadd.f32 0.0, %v1152
      %v1154 = vpop.f32.mrf.mxu0
      %v1155 = vpop.f32.mrf.mxu0
      %v1156 = vpop.f32.mrf.mxu0
      %1157 = vdwg.mxu0
      %v1158 = vpack.c.bf16 %v1153, %v1153
      %v1159 = vld [vmem:[%s6 + $0xc] sm:$0xf]
      %v1161 = vsel %vm567, %v1158, 0
      %v1164 = vsel %vm635, %v1159, 0
      %1166 = vmatprep.subr.bf16.mxu0 0
      %1167 = vmatpush1.bf16.msra.mxu0 0
      %1168 = vmatprep.subr.bf16.mxu0 0
      %1169 = vmatpush1.bf16.msra.mxu0 0
      %1170 = vmatprep.subr.bf16.mxu0 0
      %1171 = vmatpush1.bf16.msra.mxu0 0
      %1172 = vmatprep.subr.bf16.mxu0 0
      %1173 = vmatpush1.bf16.msra.mxu0 0
      %1174 = vmatprep.subr.bf16.mxu0 0
      %1175 = vmatpush1.bf16.msra.mxu0 0
      %1176 = vmatprep.subr.bf16.mxu0 0
      %1177 = vmatpush1.bf16.msra.mxu0 0
      %1178 = vmatprep.subr.bf16.mxu0 0
      %1179 = vmatpush1.bf16.msra.mxu0 0
      %1180 = vmatprep.subr.bf16.mxu0 0
      %1181 = vmatpush1.bf16.msra.mxu0 %v1164
      %1182 = vmatprep.subr.bf16.mxu0 0
      %1183 = vmatpush2.bf16.msra.mxu0 0
      %1184 = vmatprep.subr.bf16.mxu0 0
      %1185 = vmatpush2.bf16.msra.mxu0 0
      %1186 = vmatprep.subr.bf16.mxu0 0
      %1187 = vmatpush2.bf16.msra.mxu0 0
      %1188 = vmatprep.subr.bf16.mxu0 0
      %1189 = vmatpush2.bf16.msra.mxu0 0
      %1190 = vmatprep.subr.bf16.mxu0 0
      %1191 = vmatpush2.bf16.msra.mxu0 0
      %1192 = vmatprep.subr.bf16.mxu0 0
      %1193 = vmatpush2.bf16.msra.mxu0 0
      %1194 = vmatprep.subr.bf16.mxu0 0
      %1195 = vmatpush2.bf16.msra.mxu0 0
      %1196 = vmatprep.subr.bf16.mxu0 0
      %1197 = vmatpush2.bf16.msra.mxu0 0
      %1198 = vmatprep.mubr.bf16.mxu0 0
      %1199 = vmatmul.mubr.bf16.gmra.mxu0 %v1161
      %v1200 = vpop.f32.mrf.mxu0
      %v1201 = vadd.f32 0.0, %v1200
      %v1202 = vpop.f32.mrf.mxu0
      %v1203 = vpop.f32.mrf.mxu0
      %v1204 = vpop.f32.mrf.mxu0
      %1205 = vdwg.mxu0
      %v1206 = vadd.f32 %v1046, %v1201
      %v1207 = vadd.f32 %v462, %v1206
      %v1208 = vld [vmem:[%s7] sm:$0x1]
      %v1210 = vlaneseq
      %v1211 = vshrl.u32 %v1210, 7
      %v1212 = vsub.s32 0, %v1211
      %v1213 = vrot.slane %v1208, %v1212
      %v1215 = vadd.f32 %v1207, %v1213
      %1216 = vst.msk [vmem:[%s348] sm:$0xff] %vm465, %v1215
      %p1217 = scmp.lt.s32.totalorder %s23, 1
      %s1218 = scalar_select %p1217, %s23, 1
      %p1219 = scmp.lt.s32.totalorder %s24, 0
      %s1220 = scalar_select %p1219, %s24, 0
      %s1221 = sadd.s32 %s1220, %s1218
      %s1222 = smul.addr %s1221, 8
      %s1223 = scalar_lea.vmem %s8, %s1222
      // Predicated region
      $region57: #{closed_call.7} parent=51 // pred_check
        %p1224 = pneg %p231
      $region58: #{closed_call.7} parent=51 // pred_check_branch
        %1226 = sbr.rel (%p1224) target = $region60
      $region59: #{closed_call.7} parent=51 // pred_region
        _
      $region60: #{closed_call.7} parent=51 // pred_fallthru
        _
    $region52: #{closed_call.7} parent=5 // pred_fallthru
      _
    %p1227 = scmp.le.s32.totalorder 2, %s14
    // Predicated region
    $region61: #{closed_call.7} parent=5 // pred_check
      %p1228 = pneg %p1227
    $region62: #{closed_call.7} parent=5 // pred_check_branch
      %1230 = sbr.rel (%p1228) target = $region64
    $region63: #{closed_call.7} parent=5 // pred_region
      %s1231 = ssub.s32 %s14, 2
      // Predicated region
      $region65: #{closed_call.7} parent=63 // pred_check
        %p1232 = pneg %p237
      $region66: #{closed_call.7} parent=63 // pred_check_branch
        %1234 = sbr.rel (%p1232) target = $region68
      $region67: #{closed_call.7} parent=63 // pred_region
        %p1235 = scmp.lt.s32.totalorder %s25, 1
        %s1236 = scalar_select %p1235, %s25, 1
        %p1237 = scmp.lt.s32.totalorder %s26, 0
        %s1238 = scalar_select %p1237, %s26, 0
        %s1239 = sadd.s32 %s1238, %s1236
        %s1240 = smul.addr %s1239, 8
        %s1241 = scalar_lea.vmem %s8, %s1240
      $region68: #{closed_call.7} parent=63 // pred_fallthru
        _
    $region64: #{closed_call.7} parent=5 // pred_fallthru
      _
  $region6: #{closed_call.7} parent=0 // loop_footer
    %s18 = sadd.s32 1, %s14
  $region7: #{closed_call.7} parent=0 // loop_footer_branch
    %13 = sbr.rel target = $region3
  $region8: #{closed_call.7} parent=0 // loop_exit
    _

</llo_original>
